<compile_context>
chip_gen: v7x
topology: tpu7x:2x2x1
jax: 0.10.0
libtpu: 0.0.40
codegen_flags: <defaults>
</compile_context>

<pallas_src>
import functools
import math

import jax
import jax.numpy as jnp
from jax import lax
from jax.experimental import pallas as pl
from jax.experimental.pallas import tpu as pltpu


def _bert_self_attn_kernel(x_ref, w_ref, b_ref, mask_ref, o_ref,
                           *, num_heads, head_size):
    # x_ref:    (1, Bt, S, D_in)       one batch-block
    # w_ref:    (all_head, D_in)       PyTorch nn.Linear layout (resident)
    # b_ref:    (1, all_head)
    # mask_ref: (1, Bt, 1, S)          additive mask, broadcast over heads/queries
    # o_ref:    (1, Bt, S*all_head)    lane-dense output slab
    _, Bt, S, D_in = x_ref.shape
    all_head = num_heads * head_size

    # Fold batch into rows: one (Bt*S, D_in) x (D_in, all_head) projection.
    x2d = x_ref[...].reshape(Bt * S, D_in)
    w = w_ref[...]                                    # (all_head, D_in)
    bias = b_ref[...]                                 # (1, all_head)

    mixed = lax.dot_general(
        x2d, w,
        dimension_numbers=(((1,), (1,)), ((), ())),   # contract D_in with D_in
        preferred_element_type=jnp.float32,
    ) + bias                                          # (Bt*S, all_head), f32

    xl = mixed.reshape(Bt, S, all_head)               # free (leading-dim) reshape
    mask = mask_ref[...].reshape(Bt, 1, S)            # (Bt, 1, S)

    scale = 1.0 / math.sqrt(head_size)

    # Static (unrolled) loop over the few heads; each head's matmuls are
    # batched over the batch dim on the MXU.
    ctx_parts = []
    for h in range(num_heads):
        v_h = xl[:, :, h * head_size:(h + 1) * head_size]        # (Bt, S, d)
        q_h = v_h * scale                                         # scale on lhs only
        scores = jnp.einsum('bqd,bkd->bqk', q_h, v_h,
                            preferred_element_type=jnp.float32)   # (Bt, S, S)
        scores = scores + mask                                    # broadcast over queries
        # Numerically-stable softmax along the key axis.
        scores = scores - jnp.max(scores, axis=-1, keepdims=True)
        e = jnp.exp(scores)
        denom = jnp.sum(e, axis=-1, keepdims=True)
        probs = e * pl.reciprocal(denom, approx=True)             # EUP reciprocal
        # TODO(synk): attention-probs dropout omitted (inference / eval mode).
        ctx_parts.append(jnp.einsum('bqk,bkd->bqd', probs, v_h,
                                    preferred_element_type=jnp.float32))

    ctx = jnp.concatenate(ctx_parts, axis=-1)          # (Bt, S, all_head) head merge
    # Single lane-dense store: last dim S*all_head (>=128 lanes).
    o_ref[...] = ctx.reshape(1, Bt, S * all_head).astype(o_ref.dtype)


def bert_self_attention(x, attention_mask, weight, bias, num_heads,
                        *, num_batch_blocks=1):
    """x: (B, S, input_dim); attention_mask: (B, 1, 1, S) additive;
    weight: (all_head_size, input_dim) [PyTorch nn.Linear layout];
    bias: (all_head_size,).

    num_batch_blocks: grid steps over the batch. Keep 1 on v5e/v6e (single
    TensorCore: extra steps are pure overhead); use 2 on v7x so both
    TensorCores get work."""
    B, S, D_in = x.shape
    all_head = weight.shape[0]
    head_size = all_head // num_heads
    assert num_heads * head_size == all_head
    assert B % num_batch_blocks == 0
    nb = num_batch_blocks
    Bt = B // nb

    # Free (leading-dim) reshapes in the wrapper; no transposes anywhere.
    x4 = x.reshape(nb, Bt, S, D_in)
    mask4 = attention_mask.reshape(nb, Bt, 1, S)
    b2 = bias.reshape(1, all_head)

    kernel = functools.partial(
        _bert_self_attn_kernel, num_heads=num_heads, head_size=head_size)

    out = pl.pallas_call(
        kernel,
        out_shape=jax.ShapeDtypeStruct((nb, Bt, S * all_head), x.dtype),
        grid_spec=pltpu.PrefetchScalarGridSpec(
            num_scalar_prefetch=0,
            grid=(nb,),
            in_specs=[
                pl.BlockSpec((1, Bt, S, D_in), lambda b: (b, 0, 0, 0)),   # x
                pl.BlockSpec((all_head, D_in), lambda b: (0, 0)),         # W (resident)
                pl.BlockSpec((1, all_head), lambda b: (0, 0)),            # bias
                pl.BlockSpec((1, Bt, 1, S), lambda b: (b, 0, 0, 0)),      # mask
            ],
            out_specs=pl.BlockSpec((1, Bt, S * all_head), lambda b: (b, 0, 0)),
        ),
        compiler_params=pltpu.CompilerParams(
            dimension_semantics=("parallel",),   # batch blocks are independent
        ),
    )(x4, weight, b2, mask4)

    return out.reshape(B, S, all_head)


def _reference(x, attention_mask, weight, bias, num_heads):
    """Pure-JAX replica of the PyTorch forward (eval mode)."""
    B, S, _ = x.shape
    all_head = weight.shape[0]
    d = all_head // num_heads
    mixed = x @ weight.T + bias                                   # (B, S, AH)
    xl = mixed.reshape(B, S, num_heads, d).transpose(0, 2, 1, 3)  # (B, H, S, d)
    scores = jnp.einsum("bhqd,bhkd->bhqk", xl, xl) / math.sqrt(d)
    scores = scores + attention_mask                              # (B,1,1,S)
    probs = jax.nn.softmax(scores, axis=-1)
    ctx = jnp.einsum("bhqk,bhkd->bhqd", probs, xl)
    return ctx.transpose(0, 2, 1, 3).reshape(B, S, all_head)


if __name__ == "__main__":
    # Small shapes consistent with the module:
    #   input_dim = 32, num_attention_heads = 4 -> head_size = 8, seq = 8
    B, S, D, H = 2, 8, 32, 4
    key = jax.random.PRNGKey(0)
    kx, kw, kb, km = jax.random.split(key, 4)

    x = jax.random.normal(kx, (B, S, D), dtype=jnp.float32)
    weight = jax.random.uniform(kw, (D, D), minval=-0.1, maxval=0.1,
                                dtype=jnp.float32)
    bound = 1.0 / math.sqrt(D)
    bias = jax.random.uniform(kb, (D,), minval=-bound, maxval=bound,
                              dtype=jnp.float32)

    # Standard BERT additive mask: 0 = attend, -10000 = masked; shape (B,1,1,S).
    valid = (jax.random.uniform(km, (B, S)) > 0.2).astype(jnp.float32)
    valid = valid.at[:, 0].set(1.0)  # keep at least one valid key per row
    attention_mask = ((1.0 - valid) * -10000.0).reshape(B, 1, 1, S)

    out = bert_self_attention(x, attention_mask, weight, bias, H)
    out = jax.block_until_ready(out)

    ref = _reference(x, attention_mask, weight, bias, H)
    assert out.shape == (B, S, D)
    max_err = float(jnp.max(jnp.abs(out - ref)))
    # Tolerance relaxed from 1e-5 to 1e-3 for the approx (EUP) reciprocal in
    # the softmax denominator.
    assert jnp.allclose(out, ref, atol=1e-3, rtol=1e-3), max_err

    print("KERNEL_OK")
</pallas_src>

<mosaic_0001>
module attributes {stable_mosaic.version = 11 : i64} {
  func.func @_bert_self_attn_kernel(%arg0: i32, %arg1: memref<1x2x8x32xf32, #tpu.memory_space<vmem>>, %arg2: memref<32x32xf32, #tpu.memory_space<vmem>>, %arg3: memref<1x32xf32, #tpu.memory_space<vmem>>, %arg4: memref<1x2x1x8xf32, #tpu.memory_space<vmem>>, %arg5: memref<1x2x256xf32, #tpu.memory_space<vmem>>) attributes {dimension_semantics = [#tpu.dimension_semantics<parallel>], iteration_bounds = array<i64: 1>, scalar_prefetch = 0 : i64, scratch_operands = 0 : i64, tpu.core_type = #tpu.core_type<tc>, window_params = [{transform_indices = @transform_0, window_bounds = array<i64: 1, 2, 8, 32>}, {pipeline_mode = #tpu.pipeline_mode<synchronous>, transform_indices = @transform_1, window_bounds = array<i64: 32, 32>}, {pipeline_mode = #tpu.pipeline_mode<synchronous>, transform_indices = @transform_2, window_bounds = array<i64: 1, 32>}, {transform_indices = @transform_3, window_bounds = array<i64: 1, 2, 1, 8>}, {transform_indices = @transform_4, window_bounds = array<i64: 1, 2, 256>}]} {
    %c0 = arith.constant 0 : index
    %c0_0 = arith.constant 0 : index
    %c0_1 = arith.constant 0 : index
    %c0_2 = arith.constant 0 : index
    %0 = vector.load %arg1[%c0, %c0_0, %c0_1, %c0_2] : memref<1x2x8x32xf32, #tpu.memory_space<vmem>>, vector<1x2x8x32xf32>
    %1 = vector.shape_cast %0 : vector<1x2x8x32xf32> to vector<16x32xf32>
    %c0_3 = arith.constant 0 : index
    %c0_4 = arith.constant 0 : index
    %2 = vector.load %arg2[%c0_3, %c0_4] : memref<32x32xf32, #tpu.memory_space<vmem>>, vector<32x32xf32>
    %c0_5 = arith.constant 0 : index
    %c0_6 = arith.constant 0 : index
    %3 = vector.load %arg3[%c0_5, %c0_6] : memref<1x32xf32, #tpu.memory_space<vmem>>, vector<1x32xf32>
    %cst = arith.constant dense<0.000000e+00> : vector<16x32xf32>
    %4 = tpu.matmul %1, %2, %cst {dimension_numbers = #tpu.dot_dimension_numbers<[1], [1], [0], [0], [0, 0, 1, 0], [], []>} : vector<16x32xf32>, vector<32x32xf32>, vector<16x32xf32> -> vector<16x32xf32>
    %5 = vector.broadcast %3 : vector<1x32xf32> to vector<16x32xf32>
    %6 = arith.addf %4, %5 : vector<16x32xf32>
    %7 = vector.shape_cast %6 : vector<16x32xf32> to vector<2x8x32xf32>
    %c0_7 = arith.constant 0 : index
    %c0_8 = arith.constant 0 : index
    %c0_9 = arith.constant 0 : index
    %c0_10 = arith.constant 0 : index
    %8 = vector.load %arg4[%c0_7, %c0_8, %c0_9, %c0_10] : memref<1x2x1x8xf32, #tpu.memory_space<vmem>>, vector<1x2x1x8xf32>
    %9 = vector.shape_cast %8 : vector<1x2x1x8xf32> to vector<2x1x8xf32>
    %10 = vector.extract_strided_slice %7 {offsets = [0, 0, 0], sizes = [2, 8, 8], strides = [1, 1, 1]} : vector<2x8x32xf32> to vector<2x8x8xf32>
    %cst_11 = arith.constant 0.353553385 : f32
    %11 = vector.broadcast %cst_11 : f32 to vector<2x8x8xf32>
    %12 = arith.mulf %10, %11 : vector<2x8x8xf32>
    "tpu.trace_start"() <{level = 10 : i32, message = "bqd,bkd->bqk"}> : () -> ()
    %cst_12 = arith.constant dense<0.000000e+00> : vector<2x8x8xf32>
    %13 = tpu.matmul %12, %10, %cst_12 {dimension_numbers = #tpu.dot_dimension_numbers<[2], [2], [1], [1], [0, 0, 0, 1, 1, 1], [0], [0]>} : vector<2x8x8xf32>, vector<2x8x8xf32>, vector<2x8x8xf32> -> vector<2x8x8xf32>
    "tpu.trace_stop"() : () -> ()
    %14 = vector.broadcast %9 : vector<2x1x8xf32> to vector<2x8x8xf32>
    %15 = arith.addf %13, %14 : vector<2x8x8xf32>
    %cst_13 = arith.constant dense<0xFF800000> : vector<2x8xf32>
    %16 = vector.multi_reduction <maximumf>, %15, %cst_13 [2] : vector<2x8x8xf32> to vector<2x8xf32>
    %17 = vector.shape_cast %16 : vector<2x8xf32> to vector<2x8x1xf32>
    %18 = vector.broadcast %17 : vector<2x8x1xf32> to vector<2x8x8xf32>
    %19 = arith.subf %15, %18 : vector<2x8x8xf32>
    %20 = math.exp %19 : vector<2x8x8xf32>
    %cst_14 = arith.constant dense<0.000000e+00> : vector<2x8xf32>
    %21 = vector.multi_reduction <add>, %20, %cst_14 [2] : vector<2x8x8xf32> to vector<2x8xf32>
    %22 = vector.shape_cast %21 : vector<2x8xf32> to vector<2x8x1xf32>
    %23 = tpu.reciprocal %22 {approx = true} : vector<2x8x1xf32> -> vector<2x8x1xf32>
    %24 = vector.broadcast %23 : vector<2x8x1xf32> to vector<2x8x8xf32>
    %25 = arith.mulf %20, %24 : vector<2x8x8xf32>
    "tpu.trace_start"() <{level = 10 : i32, message = "bqk,bkd->bqd"}> : () -> ()
    %cst_15 = arith.constant dense<0.000000e+00> : vector<2x8x8xf32>
    %26 = tpu.matmul %25, %10, %cst_15 {dimension_numbers = #tpu.dot_dimension_numbers<[2], [1], [1], [2], [0, 0, 0, 1, 1, 2], [0], [0]>} : vector<2x8x8xf32>, vector<2x8x8xf32>, vector<2x8x8xf32> -> vector<2x8x8xf32>
    "tpu.trace_stop"() : () -> ()
    %27 = vector.extract_strided_slice %7 {offsets = [0, 0, 8], sizes = [2, 8, 8], strides = [1, 1, 1]} : vector<2x8x32xf32> to vector<2x8x8xf32>
    %cst_16 = arith.constant 0.353553385 : f32
    %28 = vector.broadcast %cst_16 : f32 to vector<2x8x8xf32>
    %29 = arith.mulf %27, %28 : vector<2x8x8xf32>
    "tpu.trace_start"() <{level = 10 : i32, message = "bqd,bkd->bqk"}> : () -> ()
    %cst_17 = arith.constant dense<0.000000e+00> : vector<2x8x8xf32>
    %30 = tpu.matmul %29, %27, %cst_17 {dimension_numbers = #tpu.dot_dimension_numbers<[2], [2], [1], [1], [0, 0, 0, 1, 1, 1], [0], [0]>} : vector<2x8x8xf32>, vector<2x8x8xf32>, vector<2x8x8xf32> -> vector<2x8x8xf32>
    "tpu.trace_stop"() : () -> ()
    %31 = vector.broadcast %9 : vector<2x1x8xf32> to vector<2x8x8xf32>
    %32 = arith.addf %30, %31 : vector<2x8x8xf32>
    %cst_18 = arith.constant dense<0xFF800000> : vector<2x8xf32>
    %33 = vector.multi_reduction <maximumf>, %32, %cst_18 [2] : vector<2x8x8xf32> to vector<2x8xf32>
    %34 = vector.shape_cast %33 : vector<2x8xf32> to vector<2x8x1xf32>
    %35 = vector.broadcast %34 : vector<2x8x1xf32> to vector<2x8x8xf32>
    %36 = arith.subf %32, %35 : vector<2x8x8xf32>
    %37 = math.exp %36 : vector<2x8x8xf32>
    %cst_19 = arith.constant dense<0.000000e+00> : vector<2x8xf32>
    %38 = vector.multi_reduction <add>, %37, %cst_19 [2] : vector<2x8x8xf32> to vector<2x8xf32>
    %39 = vector.shape_cast %38 : vector<2x8xf32> to vector<2x8x1xf32>
    %40 = tpu.reciprocal %39 {approx = true} : vector<2x8x1xf32> -> vector<2x8x1xf32>
    %41 = vector.broadcast %40 : vector<2x8x1xf32> to vector<2x8x8xf32>
    %42 = arith.mulf %37, %41 : vector<2x8x8xf32>
    "tpu.trace_start"() <{level = 10 : i32, message = "bqk,bkd->bqd"}> : () -> ()
    %cst_20 = arith.constant dense<0.000000e+00> : vector<2x8x8xf32>
    %43 = tpu.matmul %42, %27, %cst_20 {dimension_numbers = #tpu.dot_dimension_numbers<[2], [1], [1], [2], [0, 0, 0, 1, 1, 2], [0], [0]>} : vector<2x8x8xf32>, vector<2x8x8xf32>, vector<2x8x8xf32> -> vector<2x8x8xf32>
    "tpu.trace_stop"() : () -> ()
    %44 = vector.extract_strided_slice %7 {offsets = [0, 0, 16], sizes = [2, 8, 8], strides = [1, 1, 1]} : vector<2x8x32xf32> to vector<2x8x8xf32>
    %cst_21 = arith.constant 0.353553385 : f32
    %45 = vector.broadcast %cst_21 : f32 to vector<2x8x8xf32>
    %46 = arith.mulf %44, %45 : vector<2x8x8xf32>
    "tpu.trace_start"() <{level = 10 : i32, message = "bqd,bkd->bqk"}> : () -> ()
    %cst_22 = arith.constant dense<0.000000e+00> : vector<2x8x8xf32>
    %47 = tpu.matmul %46, %44, %cst_22 {dimension_numbers = #tpu.dot_dimension_numbers<[2], [2], [1], [1], [0, 0, 0, 1, 1, 1], [0], [0]>} : vector<2x8x8xf32>, vector<2x8x8xf32>, vector<2x8x8xf32> -> vector<2x8x8xf32>
    "tpu.trace_stop"() : () -> ()
    %48 = vector.broadcast %9 : vector<2x1x8xf32> to vector<2x8x8xf32>
    %49 = arith.addf %47, %48 : vector<2x8x8xf32>
    %cst_23 = arith.constant dense<0xFF800000> : vector<2x8xf32>
    %50 = vector.multi_reduction <maximumf>, %49, %cst_23 [2] : vector<2x8x8xf32> to vector<2x8xf32>
    %51 = vector.shape_cast %50 : vector<2x8xf32> to vector<2x8x1xf32>
    %52 = vector.broadcast %51 : vector<2x8x1xf32> to vector<2x8x8xf32>
    %53 = arith.subf %49, %52 : vector<2x8x8xf32>
    %54 = math.exp %53 : vector<2x8x8xf32>
    %cst_24 = arith.constant dense<0.000000e+00> : vector<2x8xf32>
    %55 = vector.multi_reduction <add>, %54, %cst_24 [2] : vector<2x8x8xf32> to vector<2x8xf32>
    %56 = vector.shape_cast %55 : vector<2x8xf32> to vector<2x8x1xf32>
    %57 = tpu.reciprocal %56 {approx = true} : vector<2x8x1xf32> -> vector<2x8x1xf32>
    %58 = vector.broadcast %57 : vector<2x8x1xf32> to vector<2x8x8xf32>
    %59 = arith.mulf %54, %58 : vector<2x8x8xf32>
    "tpu.trace_start"() <{level = 10 : i32, message = "bqk,bkd->bqd"}> : () -> ()
    %cst_25 = arith.constant dense<0.000000e+00> : vector<2x8x8xf32>
    %60 = tpu.matmul %59, %44, %cst_25 {dimension_numbers = #tpu.dot_dimension_numbers<[2], [1], [1], [2], [0, 0, 0, 1, 1, 2], [0], [0]>} : vector<2x8x8xf32>, vector<2x8x8xf32>, vector<2x8x8xf32> -> vector<2x8x8xf32>
    "tpu.trace_stop"() : () -> ()
    %61 = vector.extract_strided_slice %7 {offsets = [0, 0, 24], sizes = [2, 8, 8], strides = [1, 1, 1]} : vector<2x8x32xf32> to vector<2x8x8xf32>
    %cst_26 = arith.constant 0.353553385 : f32
    %62 = vector.broadcast %cst_26 : f32 to vector<2x8x8xf32>
    %63 = arith.mulf %61, %62 : vector<2x8x8xf32>
    "tpu.trace_start"() <{level = 10 : i32, message = "bqd,bkd->bqk"}> : () -> ()
    %cst_27 = arith.constant dense<0.000000e+00> : vector<2x8x8xf32>
    %64 = tpu.matmul %63, %61, %cst_27 {dimension_numbers = #tpu.dot_dimension_numbers<[2], [2], [1], [1], [0, 0, 0, 1, 1, 1], [0], [0]>} : vector<2x8x8xf32>, vector<2x8x8xf32>, vector<2x8x8xf32> -> vector<2x8x8xf32>
    "tpu.trace_stop"() : () -> ()
    %65 = vector.broadcast %9 : vector<2x1x8xf32> to vector<2x8x8xf32>
    %66 = arith.addf %64, %65 : vector<2x8x8xf32>
    %cst_28 = arith.constant dense<0xFF800000> : vector<2x8xf32>
    %67 = vector.multi_reduction <maximumf>, %66, %cst_28 [2] : vector<2x8x8xf32> to vector<2x8xf32>
    %68 = vector.shape_cast %67 : vector<2x8xf32> to vector<2x8x1xf32>
    %69 = vector.broadcast %68 : vector<2x8x1xf32> to vector<2x8x8xf32>
    %70 = arith.subf %66, %69 : vector<2x8x8xf32>
    %71 = math.exp %70 : vector<2x8x8xf32>
    %cst_29 = arith.constant dense<0.000000e+00> : vector<2x8xf32>
    %72 = vector.multi_reduction <add>, %71, %cst_29 [2] : vector<2x8x8xf32> to vector<2x8xf32>
    %73 = vector.shape_cast %72 : vector<2x8xf32> to vector<2x8x1xf32>
    %74 = tpu.reciprocal %73 {approx = true} : vector<2x8x1xf32> -> vector<2x8x1xf32>
    %75 = vector.broadcast %74 : vector<2x8x1xf32> to vector<2x8x8xf32>
    %76 = arith.mulf %71, %75 : vector<2x8x8xf32>
    "tpu.trace_start"() <{level = 10 : i32, message = "bqk,bkd->bqd"}> : () -> ()
    %cst_30 = arith.constant dense<0.000000e+00> : vector<2x8x8xf32>
    %77 = tpu.matmul %76, %61, %cst_30 {dimension_numbers = #tpu.dot_dimension_numbers<[2], [1], [1], [2], [0, 0, 0, 1, 1, 2], [0], [0]>} : vector<2x8x8xf32>, vector<2x8x8xf32>, vector<2x8x8xf32> -> vector<2x8x8xf32>
    "tpu.trace_stop"() : () -> ()
    %78 = tpu.concatenate %26, %43, %60, %77 in 2 : vector<2x8x8xf32>, vector<2x8x8xf32>, vector<2x8x8xf32>, vector<2x8x8xf32> -> vector<2x8x32xf32>
    %79 = vector.shape_cast %78 : vector<2x8x32xf32> to vector<1x2x256xf32>
    %c0_31 = arith.constant 0 : index
    %c0_32 = arith.constant 0 : index
    %c0_33 = arith.constant 0 : index
    %80 = vector.load %arg5[%c0_31, %c0_32, %c0_33] : memref<1x2x256xf32, #tpu.memory_space<vmem>>, vector<1x2x256xf32>
    tpu.vector_store %arg5[%c0_31, %c0_32, %c0_33], %79 {strides = array<i32>} : memref<1x2x256xf32, #tpu.memory_space<vmem>>, vector<1x2x256xf32>,
    return
  }
  func.func @transform_0(%arg0: i32) -> (i32, i32, i32, i32) {
    %c0_i32 = arith.constant 0 : i32
    %c0_i32_0 = arith.constant 0 : i32
    %c0_i32_1 = arith.constant 0 : i32
    %c0_i32_2 = arith.constant 0 : i32
    return %arg0, %c0_i32, %c0_i32_0, %c0_i32_1 : i32, i32, i32, i32
  }
  func.func @transform_1(%arg0: i32) -> (i32, i32) {
    %c0_i32 = arith.constant 0 : i32
    %c0_i32_0 = arith.constant 0 : i32
    %c0_i32_1 = arith.constant 0 : i32
    return %c0_i32, %c0_i32_0 : i32, i32
  }
  func.func @transform_2(%arg0: i32) -> (i32, i32) {
    %c0_i32 = arith.constant 0 : i32
    %c0_i32_0 = arith.constant 0 : i32
    %c0_i32_1 = arith.constant 0 : i32
    return %c0_i32, %c0_i32_0 : i32, i32
  }
  func.func @transform_3(%arg0: i32) -> (i32, i32, i32, i32) {
    %c0_i32 = arith.constant 0 : i32
    %c0_i32_0 = arith.constant 0 : i32
    %c0_i32_1 = arith.constant 0 : i32
    %c0_i32_2 = arith.constant 0 : i32
    return %arg0, %c0_i32, %c0_i32_0, %c0_i32_1 : i32, i32, i32, i32
  }
  func.func @transform_4(%arg0: i32) -> (i32, i32, i32) {
    %c0_i32 = arith.constant 0 : i32
    %c0_i32_0 = arith.constant 0 : i32
    %c0_i32_1 = arith.constant 0 : i32
    return %arg0, %c0_i32, %c0_i32_0 : i32, i32, i32
  }
}

</mosaic_0001>

<llo_original>
// kernel: tpu_custom_call.1
$region0: #{tpu_custom_call.1}
  #allocation0 [shape = 'u32[]', space=smem, size = 0x4, offset = 0x4, fixed_abs, tag = 'smem constant byte address 0x4 - core index']
  #allocation1 [shape = 'u32[144,128]{1,0:T(1,128)}', space=vmem, size = 0x12000, scoped, tag = 'internal scratch']
  %s0 = inlined_call_operand.hbm [shape: f32[1,2,8,32], index: 0, kind: input, shape index: {}]
  %s1 = inlined_call_operand.hbm [shape: f32[32,32], index: 1, kind: input, shape index: {}]
  %s2 = inlined_call_operand.vmem [shape: f32[1,32], index: 2, kind: input, shape index: {}]
  %s3 = inlined_call_operand.vmem [shape: f32[1,2,1,8], index: 3, kind: input, shape index: {}]
  %s4 = inlined_call_operand.hbm [shape: f32[1,2,256], index: 4, kind: output, shape index: {}]
  %s5 = sld [smem:[#allocation0]]
  $region34: #{tpu_custom_call.1} parent=0
    _
  %s7 = ssub.s32 1, %s5
  %s8 = scalar_select 0, %s7, %s5
  $region1: #{tpu_custom_call.1} parent=0
    #allocation2 [shape = 'u8[8192]{0}', space=vmem, size = 0x2000, scoped, tag = 'input window, operand 0, single buffered']
    #allocation3 [shape = 's32[1]{0}', space=sflag, size = 0x4, scoped, tag = 'scoped memory for tpu_custom_call.1']
    #allocation4 [shape = 's32[1]{0}', space=sflag, size = 0x4, scoped, tag = 'scoped memory for tpu_custom_call.1']
    #allocation5 [shape = 'u8[16384]{0}', space=vmem, size = 0x4000, scoped, tag = 'input window, operand 1, single buffered']
    #allocation6 [shape = 's32[1]{0}', space=sflag, size = 0x4, scoped, tag = 'scoped memory for tpu_custom_call.1']
    #allocation7 [shape = 'u8[2048]{0}', space=vmem, size = 0x800, scoped, tag = 'output window, operand 0, single buffered']
    %9 = vsyncpa [#allocation3], 0
    %10 = vsyncpa [#allocation6], 0
    %11 = vsyncpa [#allocation4], 0
    // Predicated region
    $region2: #{tpu_custom_call.1} parent=1 // pred_check
      _
    $region3: #{tpu_custom_call.1} parent=1 // pred_check_branch
      %13 = sbr.rel (0) target = $region5
    $region4: #{tpu_custom_call.1} parent=1 // pred_region
      %s15 = ssub.s32 256, 256
      %16 = vsyncadd [#allocation3], %s15
      %s17 = sshll.u32 [#allocation2], 4
      %s18 = int_to_ptr.vmem [resolvable:$true] %s17
      %23 = dma.hbm_to_vmem [thread:$0]  %s0, 256, %s18, [#allocation3], 128, 128, 8
    $region5: #{tpu_custom_call.1} parent=1 // pred_fallthru
      _
    // Predicated region
    $region6: #{tpu_custom_call.1} parent=1 // pred_check
      _
    $region7: #{tpu_custom_call.1} parent=1 // pred_check_branch
      %25 = sbr.rel (0) target = $region9
    $region8: #{tpu_custom_call.1} parent=1 // pred_region
      %s27 = ssub.s32 512, 512
      %28 = vsyncadd [#allocation6], %s27
      %s29 = sshll.u32 [#allocation5], 4
      %s30 = int_to_ptr.vmem [resolvable:$true] %s29
      %35 = dma.hbm_to_vmem [thread:$0]  %s1, 512, %s30, [#allocation6], 128, 128, 8
    $region9: #{tpu_custom_call.1} parent=1 // pred_fallthru
      _
    // Predicated region
    $region10: #{tpu_custom_call.1} parent=1 // pred_check
      _
    $region11: #{tpu_custom_call.1} parent=1 // pred_check_branch
      %37 = sbr.rel (0) target = $region13
    $region12: #{tpu_custom_call.1} parent=1 // pred_region
      _
    $region13: #{tpu_custom_call.1} parent=1 // pred_fallthru
      _
    // Predicated region
    $region14: #{tpu_custom_call.1} parent=1 // pred_check
      _
    $region15: #{tpu_custom_call.1} parent=1 // pred_check_branch
      %39 = sbr.rel (0) target = $region17
    $region16: #{tpu_custom_call.1} parent=1 // pred_region
      _
    $region17: #{tpu_custom_call.1} parent=1 // pred_fallthru
      _
    // Predicated region
    $region18: #{tpu_custom_call.1} parent=1 // pred_check
      _
    $region19: #{tpu_custom_call.1} parent=1 // pred_check_branch
      %41 = sbr.rel (0) target = $region21
    $region20: #{tpu_custom_call.1} parent=1 // pred_region
      %42 = dma.done [#allocation3], 256
    $region21: #{tpu_custom_call.1} parent=1 // pred_fallthru
      _
    // Predicated region
    $region22: #{tpu_custom_call.1} parent=1 // pred_check
      _
    $region23: #{tpu_custom_call.1} parent=1 // pred_check_branch
      %44 = sbr.rel (0) target = $region25
    $region24: #{tpu_custom_call.1} parent=1 // pred_region
      %45 = dma.done [#allocation6], 512
    $region25: #{tpu_custom_call.1} parent=1 // pred_fallthru
      _
    %v46 = vld [vmem:[#allocation2] sm:$0xff]
    %v47 = vld [vmem:[#allocation2 + $0x8] sm:$0xff]
    %v48 = vld [vmem:[#allocation5] sm:$0xff]
    %v49 = vld [vmem:[#allocation5 + $0x8] sm:$0xff]
    %v50 = vld [vmem:[#allocation5 + $0x10] sm:$0xff]
    %v51 = vld [vmem:[#allocation5 + $0x18] sm:$0xff]
    %v52 = vld [vmem:[%s2] sm:$0x1]
    %v54 = vlaneseq
    %v55 = vshrl.u32 %v54, 7
    %v56 = vsub.s32 0, %v55
    %v57 = vrot.slane %v52, %v56
    %vm59 = vcmask 261120
    %v61 = vsel %vm59, %v46, 0
    %v64 = vsel %vm59, %v47, 0
    %v67 = vsel %vm59, %v48, 0
    %v70 = vsel %vm59, %v49, 0
    %v73 = vsel %vm59, %v50, 0
    %v76 = vsel %vm59, %v51, 0
    %78 = vmatprep.subr.mxu0 0.0
    %79 = vmatpush1.xpose.msra.mxu0 %v67
    %80 = vmatprep.subr.mxu0 0.0
    %81 = vmatpush1.xpose.msra.mxu0 %v70
    %82 = vmatprep.subr.mxu0 0.0
    %83 = vmatpush1.xpose.msra.mxu0 %v73
    %84 = vmatprep.subr.mxu0 0.0
    %85 = vmatpush1.xpose.msra.mxu0 %v76
    %86 = vmatprep.subr.mxu0 0.0
    %87 = vmatpush1.xpose.msra.mxu0 0.0
    %88 = vmatprep.subr.mxu0 0.0
    %89 = vmatpush1.xpose.msra.mxu0 0.0
    %90 = vmatprep.subr.mxu0 0.0
    %91 = vmatpush1.xpose.msra.mxu0 0.0
    %92 = vmatprep.subr.mxu0 0.0
    %93 = vmatpush1.xpose.msra.mxu0 0.0
    %94 = vmatprep.subr.mxu0 0.0
    %95 = vmatpush1.xpose.msra.mxu0 0.0
    %96 = vmatprep.subr.mxu0 0.0
    %97 = vmatpush1.xpose.msra.mxu0 0.0
    %98 = vmatprep.subr.mxu0 0.0
    %99 = vmatpush1.xpose.msra.mxu0 0.0
    %100 = vmatprep.subr.mxu0 0.0
    %101 = vmatpush1.xpose.msra.mxu0 0.0
    %102 = vmatprep.subr.mxu0 0.0
    %103 = vmatpush1.xpose.msra.mxu0 0.0
    %104 = vmatprep.subr.mxu0 0.0
    %105 = vmatpush1.xpose.msra.mxu0 0.0
    %106 = vmatprep.subr.mxu0 0.0
    %107 = vmatpush1.xpose.msra.mxu0 0.0
    %108 = vmatprep.subr.mxu0 0.0
    %109 = vmatpush1.xpose.msra.mxu0 0.0
    %110 = vmatprep.subr.mxu0 0.0
    %111 = vmatpush1.xpose.msra.mxu0 0.0
    %112 = vmatprep.subr.mxu0 0.0
    %113 = vmatpush1.xpose.msra.mxu0 0.0
    %114 = vmatprep.subr.mxu0 0.0
    %115 = vmatpush1.xpose.msra.mxu0 0.0
    %116 = vmatprep.subr.mxu0 0.0
    %117 = vmatpush1.xpose.msra.mxu0 0.0
    %118 = vmatprep.subr.mxu0 0.0
    %119 = vmatpush1.xpose.msra.mxu0 0.0
    %120 = vmatprep.subr.mxu0 0.0
    %121 = vmatpush1.xpose.msra.mxu0 0.0
    %122 = vmatprep.subr.mxu0 0.0
    %123 = vmatpush1.xpose.msra.mxu0 0.0
    %124 = vmatprep.subr.mxu0 0.0
    %125 = vmatpush1.xpose.msra.mxu0 0.0
    %126 = vmatprep.subr.mxu0 0.0
    %127 = vmatpush1.xpose.msra.mxu0 0.0
    %128 = vmatprep.subr.mxu0 0.0
    %129 = vmatpush1.xpose.msra.mxu0 0.0
    %130 = vmatprep.subr.mxu0 0.0
    %131 = vmatpush1.xpose.msra.mxu0 0.0
    %132 = vmatprep.subr.mxu0 0.0
    %133 = vmatpush1.xpose.msra.mxu0 0.0
    %134 = vmatprep.subr.mxu0 0.0
    %135 = vmatpush1.xpose.msra.mxu0 0.0
    %136 = vmatprep.subr.mxu0 0.0
    %137 = vmatpush1.xpose.msra.mxu0 0.0
    %138 = vmatprep.subr.mxu0 0.0
    %139 = vmatpush1.xpose.msra.mxu0 0.0
    %140 = vmatprep.subr.mxu0 0.0
    %141 = vmatpush1.xpose.msra.mxu0 0.0
    %142 = vmatprep.mubr.f32.mxu0 0.0
    %143 = vmatmul.mubr.f32.gmra.mrb[0].mxu0 %v61
    %v144 = vpop.f32.mrb[0].mxu0
    %v145 = vadd.f32 %v57, %v144
    %v146 = vpop.f32.mrb[0].mxu0
    %147 = vmatprep.mubr.f32.mxu0 0.0
    %148 = vmatmul.mubr.f32.gmra.mrb[0].mxu0 %v64
    %v149 = vpop.f32.mrb[0].mxu0
    %v150 = vadd.f32 %v57, %v149
    %v151 = vpop.f32.mrb[0].mxu0
    %152 = vdwg.mxu0
    %v153 = vld [vmem:[%s3] sm:$0x1]
    %v154 = vld [vmem:[%s3 + $0x1] sm:$0x1]
    %v155 = vmul.f32 %v145, 0.35355338
    %v156 = vmul.f32 %v150, 0.35355338
    %v159 = vlaneseq
    %v160 = vshrl.u32 %v159, 7
    %v161 = vsub.s32 0, %v160
    %v162 = vrot.slane %v153, %v161
    %v163 = vlaneseq
    %v164 = vshrl.u32 %v163, 7
    %v165 = vsub.s32 0, %v164
    %v166 = vrot.slane %v154, %v165
    %vm169 = vcmask 64512
    %v171 = vsel %vm169, %v155, 0
    %v174 = vsel %vm169, %v145, 0
    %176 = vmatprep.subr.mxu0 0.0
    %177 = vmatpush1.xpose.msra.mxu0 %v174
    %178 = vmatprep.subr.mxu0 0.0
    %179 = vmatpush1.xpose.msra.mxu0 0.0
    %180 = vmatprep.subr.mxu0 0.0
    %181 = vmatpush1.xpose.msra.mxu0 0.0
    %182 = vmatprep.subr.mxu0 0.0
    %183 = vmatpush1.xpose.msra.mxu0 0.0
    %184 = vmatprep.subr.mxu0 0.0
    %185 = vmatpush1.xpose.msra.mxu0 0.0
    %186 = vmatprep.subr.mxu0 0.0
    %187 = vmatpush1.xpose.msra.mxu0 0.0
    %188 = vmatprep.subr.mxu0 0.0
    %189 = vmatpush1.xpose.msra.mxu0 0.0
    %190 = vmatprep.subr.mxu0 0.0
    %191 = vmatpush1.xpose.msra.mxu0 0.0
    %192 = vmatprep.subr.mxu0 0.0
    %193 = vmatpush1.xpose.msra.mxu0 0.0
    %194 = vmatprep.subr.mxu0 0.0
    %195 = vmatpush1.xpose.msra.mxu0 0.0
    %196 = vmatprep.subr.mxu0 0.0
    %197 = vmatpush1.xpose.msra.mxu0 0.0
    %198 = vmatprep.subr.mxu0 0.0
    %199 = vmatpush1.xpose.msra.mxu0 0.0
    %200 = vmatprep.subr.mxu0 0.0
    %201 = vmatpush1.xpose.msra.mxu0 0.0
    %202 = vmatprep.subr.mxu0 0.0
    %203 = vmatpush1.xpose.msra.mxu0 0.0
    %204 = vmatprep.subr.mxu0 0.0
    %205 = vmatpush1.xpose.msra.mxu0 0.0
    %206 = vmatprep.subr.mxu0 0.0
    %207 = vmatpush1.xpose.msra.mxu0 0.0
    %208 = vmatprep.subr.mxu0 0.0
    %209 = vmatpush1.xpose.msra.mxu0 0.0
    %210 = vmatprep.subr.mxu0 0.0
    %211 = vmatpush1.xpose.msra.mxu0 0.0
    %212 = vmatprep.subr.mxu0 0.0
    %213 = vmatpush1.xpose.msra.mxu0 0.0
    %214 = vmatprep.subr.mxu0 0.0
    %215 = vmatpush1.xpose.msra.mxu0 0.0
    %216 = vmatprep.subr.mxu0 0.0
    %217 = vmatpush1.xpose.msra.mxu0 0.0
    %218 = vmatprep.subr.mxu0 0.0
    %219 = vmatpush1.xpose.msra.mxu0 0.0
    %220 = vmatprep.subr.mxu0 0.0
    %221 = vmatpush1.xpose.msra.mxu0 0.0
    %222 = vmatprep.subr.mxu0 0.0
    %223 = vmatpush1.xpose.msra.mxu0 0.0
    %224 = vmatprep.subr.mxu0 0.0
    %225 = vmatpush1.xpose.msra.mxu0 0.0
    %226 = vmatprep.subr.mxu0 0.0
    %227 = vmatpush1.xpose.msra.mxu0 0.0
    %228 = vmatprep.subr.mxu0 0.0
    %229 = vmatpush1.xpose.msra.mxu0 0.0
    %230 = vmatprep.subr.mxu0 0.0
    %231 = vmatpush1.xpose.msra.mxu0 0.0
    %232 = vmatprep.subr.mxu0 0.0
    %233 = vmatpush1.xpose.msra.mxu0 0.0
    %234 = vmatprep.subr.mxu0 0.0
    %235 = vmatpush1.xpose.msra.mxu0 0.0
    %236 = vmatprep.subr.mxu0 0.0
    %237 = vmatpush1.xpose.msra.mxu0 0.0
    %238 = vmatprep.subr.mxu0 0.0
    %239 = vmatpush1.xpose.msra.mxu0 0.0
    %240 = vmatprep.mubr.f32.mxu0 0.0
    %241 = vmatmul.mubr.f32.gmra.mrb[0].mxu0 %v171
    %v242 = vpop.f32.mrb[0].mxu0
    %v243 = vadd.f32 %v162, %v242
    %v244 = vpop.f32.mrb[0].mxu0
    %245 = vdwg.mxu0
    %v247 = vsel %vm169, %v156, 0
    %v250 = vsel %vm169, %v150, 0
    %252 = vmatprep.subr.mxu0 0.0
    %253 = vmatpush1.xpose.msra.mxu0 %v250
    %254 = vmatprep.subr.mxu0 0.0
    %255 = vmatpush1.xpose.msra.mxu0 0.0
    %256 = vmatprep.subr.mxu0 0.0
    %257 = vmatpush1.xpose.msra.mxu0 0.0
    %258 = vmatprep.subr.mxu0 0.0
    %259 = vmatpush1.xpose.msra.mxu0 0.0
    %260 = vmatprep.subr.mxu0 0.0
    %261 = vmatpush1.xpose.msra.mxu0 0.0
    %262 = vmatprep.subr.mxu0 0.0
    %263 = vmatpush1.xpose.msra.mxu0 0.0
    %264 = vmatprep.subr.mxu0 0.0
    %265 = vmatpush1.xpose.msra.mxu0 0.0
    %266 = vmatprep.subr.mxu0 0.0
    %267 = vmatpush1.xpose.msra.mxu0 0.0
    %268 = vmatprep.subr.mxu0 0.0
    %269 = vmatpush1.xpose.msra.mxu0 0.0
    %270 = vmatprep.subr.mxu0 0.0
    %271 = vmatpush1.xpose.msra.mxu0 0.0
    %272 = vmatprep.subr.mxu0 0.0
    %273 = vmatpush1.xpose.msra.mxu0 0.0
    %274 = vmatprep.subr.mxu0 0.0
    %275 = vmatpush1.xpose.msra.mxu0 0.0
    %276 = vmatprep.subr.mxu0 0.0
    %277 = vmatpush1.xpose.msra.mxu0 0.0
    %278 = vmatprep.subr.mxu0 0.0
    %279 = vmatpush1.xpose.msra.mxu0 0.0
    %280 = vmatprep.subr.mxu0 0.0
    %281 = vmatpush1.xpose.msra.mxu0 0.0
    %282 = vmatprep.subr.mxu0 0.0
    %283 = vmatpush1.xpose.msra.mxu0 0.0
    %284 = vmatprep.subr.mxu0 0.0
    %285 = vmatpush1.xpose.msra.mxu0 0.0
    %286 = vmatprep.subr.mxu0 0.0
    %287 = vmatpush1.xpose.msra.mxu0 0.0
    %288 = vmatprep.subr.mxu0 0.0
    %289 = vmatpush1.xpose.msra.mxu0 0.0
    %290 = vmatprep.subr.mxu0 0.0
    %291 = vmatpush1.xpose.msra.mxu0 0.0
    %292 = vmatprep.subr.mxu0 0.0
    %293 = vmatpush1.xpose.msra.mxu0 0.0
    %294 = vmatprep.subr.mxu0 0.0
    %295 = vmatpush1.xpose.msra.mxu0 0.0
    %296 = vmatprep.subr.mxu0 0.0
    %297 = vmatpush1.xpose.msra.mxu0 0.0
    %298 = vmatprep.subr.mxu0 0.0
    %299 = vmatpush1.xpose.msra.mxu0 0.0
    %300 = vmatprep.subr.mxu0 0.0
    %301 = vmatpush1.xpose.msra.mxu0 0.0
    %302 = vmatprep.subr.mxu0 0.0
    %303 = vmatpush1.xpose.msra.mxu0 0.0
    %304 = vmatprep.subr.mxu0 0.0
    %305 = vmatpush1.xpose.msra.mxu0 0.0
    %306 = vmatprep.subr.mxu0 0.0
    %307 = vmatpush1.xpose.msra.mxu0 0.0
    %308 = vmatprep.subr.mxu0 0.0
    %309 = vmatpush1.xpose.msra.mxu0 0.0
    %310 = vmatprep.subr.mxu0 0.0
    %311 = vmatpush1.xpose.msra.mxu0 0.0
    %312 = vmatprep.subr.mxu0 0.0
    %313 = vmatpush1.xpose.msra.mxu0 0.0
    %314 = vmatprep.subr.mxu0 0.0
    %315 = vmatpush1.xpose.msra.mxu0 0.0
    %316 = vmatprep.mubr.f32.mxu0 0.0
    %317 = vmatmul.mubr.f32.gmra.mrb[0].mxu0 %v247
    %v318 = vpop.f32.mrb[0].mxu0
    %v319 = vadd.f32 %v166, %v318
    %v320 = vpop.f32.mrb[0].mxu0
    %321 = vdwg.mxu0
    %v322 = vsel %vm169, %v243, -inf
    %323 = vmax.xlane.f32.xlu0 %v322
    %v324 = vpop.xlane.xlu0 %323
    %v325 = vsel %vm169, %v319, -inf
    %326 = vmax.xlane.f32.xlu0 %v325
    %v327 = vpop.xlane.xlu0 %326
    %v328 = vsub.f32 %v243, %v324
    %v329 = vsub.f32 %v319, %v327
    %v330 = vmul.f32 %v328, 1.442695
    %v331 = vpow.pop %v330
    %v332 = vmul.f32 %v329, 1.442695
    %v333 = vpow.pop %v332
    %v334 = vsel %vm169, %v331, 0.0
    %335 = vadd.xlane.f32.xlu0 %v334
    %v336 = vpop.xlane.xlu0 %335
    %v337 = vsel %vm169, %v333, 0.0
    %338 = vadd.xlane.f32.xlu0 %v337
    %v339 = vpop.xlane.xlu0 %338
    %v340 = vrcp.pop %v336
    %v341 = vrcp.pop %v339
    %v342 = vmul.f32 %v331, %v340
    %v343 = vmul.f32 %v333, %v341
    %v345 = vsel %vm169, %v342, 0
    %347 = vmatprep.subr.mxu0 0.0
    %348 = vmatpush1.msra.mxu0 %v145
    %349 = vmatprep.subr.mxu0 0.0
    %350 = vmatpush1.msra.mxu0 0.0
    %351 = vmatprep.subr.mxu0 0.0
    %352 = vmatpush1.msra.mxu0 0.0
    %353 = vmatprep.subr.mxu0 0.0
    %354 = vmatpush1.msra.mxu0 0.0
    %355 = vmatprep.subr.mxu0 0.0
    %356 = vmatpush1.msra.mxu0 0.0
    %357 = vmatprep.subr.mxu0 0.0
    %358 = vmatpush1.msra.mxu0 0.0
    %359 = vmatprep.subr.mxu0 0.0
    %360 = vmatpush1.msra.mxu0 0.0
    %361 = vmatprep.subr.mxu0 0.0
    %362 = vmatpush1.msra.mxu0 0.0
    %363 = vmatprep.subr.mxu0 0.0
    %364 = vmatpush1.msra.mxu0 0.0
    %365 = vmatprep.subr.mxu0 0.0
    %366 = vmatpush1.msra.mxu0 0.0
    %367 = vmatprep.subr.mxu0 0.0
    %368 = vmatpush1.msra.mxu0 0.0
    %369 = vmatprep.subr.mxu0 0.0
    %370 = vmatpush1.msra.mxu0 0.0
    %371 = vmatprep.subr.mxu0 0.0
    %372 = vmatpush1.msra.mxu0 0.0
    %373 = vmatprep.subr.mxu0 0.0
    %374 = vmatpush1.msra.mxu0 0.0
    %375 = vmatprep.subr.mxu0 0.0
    %376 = vmatpush1.msra.mxu0 0.0
    %377 = vmatprep.subr.mxu0 0.0
    %378 = vmatpush1.msra.mxu0 0.0
    %379 = vmatprep.subr.mxu0 0.0
    %380 = vmatpush1.msra.mxu0 0.0
    %381 = vmatprep.subr.mxu0 0.0
    %382 = vmatpush1.msra.mxu0 0.0
    %383 = vmatprep.subr.mxu0 0.0
    %384 = vmatpush1.msra.mxu0 0.0
    %385 = vmatprep.subr.mxu0 0.0
    %386 = vmatpush1.msra.mxu0 0.0
    %387 = vmatprep.subr.mxu0 0.0
    %388 = vmatpush1.msra.mxu0 0.0
    %389 = vmatprep.subr.mxu0 0.0
    %390 = vmatpush1.msra.mxu0 0.0
    %391 = vmatprep.subr.mxu0 0.0
    %392 = vmatpush1.msra.mxu0 0.0
    %393 = vmatprep.subr.mxu0 0.0
    %394 = vmatpush1.msra.mxu0 0.0
    %395 = vmatprep.subr.mxu0 0.0
    %396 = vmatpush1.msra.mxu0 0.0
    %397 = vmatprep.subr.mxu0 0.0
    %398 = vmatpush1.msra.mxu0 0.0
    %399 = vmatprep.subr.mxu0 0.0
    %400 = vmatpush1.msra.mxu0 0.0
    %401 = vmatprep.subr.mxu0 0.0
    %402 = vmatpush1.msra.mxu0 0.0
    %403 = vmatprep.subr.mxu0 0.0
    %404 = vmatpush1.msra.mxu0 0.0
    %405 = vmatprep.subr.mxu0 0.0
    %406 = vmatpush1.msra.mxu0 0.0
    %407 = vmatprep.subr.mxu0 0.0
    %408 = vmatpush1.msra.mxu0 0.0
    %409 = vmatprep.subr.mxu0 0.0
    %410 = vmatpush1.msra.mxu0 0.0
    %411 = vmatprep.mubr.f32.mxu0 0.0
    %412 = vmatmul.mubr.f32.gmra.mrb[0].mxu0 %v345
    %v413 = vpop.f32.mrb[0].mxu0
    %v414 = vadd.f32 0.0, %v413
    %v415 = vpop.f32.mrb[0].mxu0
    %416 = vdwg.mxu0
    %v418 = vsel %vm169, %v343, 0
    %420 = vmatprep.subr.mxu0 0.0
    %421 = vmatpush1.msra.mxu0 %v150
    %422 = vmatprep.subr.mxu0 0.0
    %423 = vmatpush1.msra.mxu0 0.0
    %424 = vmatprep.subr.mxu0 0.0
    %425 = vmatpush1.msra.mxu0 0.0
    %426 = vmatprep.subr.mxu0 0.0
    %427 = vmatpush1.msra.mxu0 0.0
    %428 = vmatprep.subr.mxu0 0.0
    %429 = vmatpush1.msra.mxu0 0.0
    %430 = vmatprep.subr.mxu0 0.0
    %431 = vmatpush1.msra.mxu0 0.0
    %432 = vmatprep.subr.mxu0 0.0
    %433 = vmatpush1.msra.mxu0 0.0
    %434 = vmatprep.subr.mxu0 0.0
    %435 = vmatpush1.msra.mxu0 0.0
    %436 = vmatprep.subr.mxu0 0.0
    %437 = vmatpush1.msra.mxu0 0.0
    %438 = vmatprep.subr.mxu0 0.0
    %439 = vmatpush1.msra.mxu0 0.0
    %440 = vmatprep.subr.mxu0 0.0
    %441 = vmatpush1.msra.mxu0 0.0
    %442 = vmatprep.subr.mxu0 0.0
    %443 = vmatpush1.msra.mxu0 0.0
    %444 = vmatprep.subr.mxu0 0.0
    %445 = vmatpush1.msra.mxu0 0.0
    %446 = vmatprep.subr.mxu0 0.0
    %447 = vmatpush1.msra.mxu0 0.0
    %448 = vmatprep.subr.mxu0 0.0
    %449 = vmatpush1.msra.mxu0 0.0
    %450 = vmatprep.subr.mxu0 0.0
    %451 = vmatpush1.msra.mxu0 0.0
    %452 = vmatprep.subr.mxu0 0.0
    %453 = vmatpush1.msra.mxu0 0.0
    %454 = vmatprep.subr.mxu0 0.0
    %455 = vmatpush1.msra.mxu0 0.0
    %456 = vmatprep.subr.mxu0 0.0
    %457 = vmatpush1.msra.mxu0 0.0
    %458 = vmatprep.subr.mxu0 0.0
    %459 = vmatpush1.msra.mxu0 0.0
    %460 = vmatprep.subr.mxu0 0.0
    %461 = vmatpush1.msra.mxu0 0.0
    %462 = vmatprep.subr.mxu0 0.0
    %463 = vmatpush1.msra.mxu0 0.0
    %464 = vmatprep.subr.mxu0 0.0
    %465 = vmatpush1.msra.mxu0 0.0
    %466 = vmatprep.subr.mxu0 0.0
    %467 = vmatpush1.msra.mxu0 0.0
    %468 = vmatprep.subr.mxu0 0.0
    %469 = vmatpush1.msra.mxu0 0.0
    %470 = vmatprep.subr.mxu0 0.0
    %471 = vmatpush1.msra.mxu0 0.0
    %472 = vmatprep.subr.mxu0 0.0
    %473 = vmatpush1.msra.mxu0 0.0
    %474 = vmatprep.subr.mxu0 0.0
    %475 = vmatpush1.msra.mxu0 0.0
    %476 = vmatprep.subr.mxu0 0.0
    %477 = vmatpush1.msra.mxu0 0.0
    %478 = vmatprep.subr.mxu0 0.0
    %479 = vmatpush1.msra.mxu0 0.0
    %480 = vmatprep.subr.mxu0 0.0
    %481 = vmatpush1.msra.mxu0 0.0
    %482 = vmatprep.subr.mxu0 0.0
    %483 = vmatpush1.msra.mxu0 0.0
    %484 = vmatprep.mubr.f32.mxu0 0.0
    %485 = vmatmul.mubr.f32.gmra.mrb[0].mxu0 %v418
    %v486 = vpop.f32.mrb[0].mxu0
    %v487 = vadd.f32 0.0, %v486
    %v488 = vpop.f32.mrb[0].mxu0
    %489 = vdwg.mxu0
    %490 = vrot.lane.b32.xlu0 %v155, 120
    %v491 = vpop.permute.xlu0 %490
    %492 = vrot.lane.b32.xlu0 %v145, 120
    %v493 = vpop.permute.xlu0 %492
    %v494 = vsel %vm169, %v491, 0
    %v496 = vsel %vm169, %v493, 0
    %498 = vmatprep.subr.mxu0 0.0
    %499 = vmatpush1.xpose.msra.mxu0 %v496
    %500 = vmatprep.subr.mxu0 0.0
    %501 = vmatpush1.xpose.msra.mxu0 0.0
    %502 = vmatprep.subr.mxu0 0.0
    %503 = vmatpush1.xpose.msra.mxu0 0.0
    %504 = vmatprep.subr.mxu0 0.0
    %505 = vmatpush1.xpose.msra.mxu0 0.0
    %506 = vmatprep.subr.mxu0 0.0
    %507 = vmatpush1.xpose.msra.mxu0 0.0
    %508 = vmatprep.subr.mxu0 0.0
    %509 = vmatpush1.xpose.msra.mxu0 0.0
    %510 = vmatprep.subr.mxu0 0.0
    %511 = vmatpush1.xpose.msra.mxu0 0.0
    %512 = vmatprep.subr.mxu0 0.0
    %513 = vmatpush1.xpose.msra.mxu0 0.0
    %514 = vmatprep.subr.mxu0 0.0
    %515 = vmatpush1.xpose.msra.mxu0 0.0
    %516 = vmatprep.subr.mxu0 0.0
    %517 = vmatpush1.xpose.msra.mxu0 0.0
    %518 = vmatprep.subr.mxu0 0.0
    %519 = vmatpush1.xpose.msra.mxu0 0.0
    %520 = vmatprep.subr.mxu0 0.0
    %521 = vmatpush1.xpose.msra.mxu0 0.0
    %522 = vmatprep.subr.mxu0 0.0
    %523 = vmatpush1.xpose.msra.mxu0 0.0
    %524 = vmatprep.subr.mxu0 0.0
    %525 = vmatpush1.xpose.msra.mxu0 0.0
    %526 = vmatprep.subr.mxu0 0.0
    %527 = vmatpush1.xpose.msra.mxu0 0.0
    %528 = vmatprep.subr.mxu0 0.0
    %529 = vmatpush1.xpose.msra.mxu0 0.0
    %530 = vmatprep.subr.mxu0 0.0
    %531 = vmatpush1.xpose.msra.mxu0 0.0
    %532 = vmatprep.subr.mxu0 0.0
    %533 = vmatpush1.xpose.msra.mxu0 0.0
    %534 = vmatprep.subr.mxu0 0.0
    %535 = vmatpush1.xpose.msra.mxu0 0.0
    %536 = vmatprep.subr.mxu0 0.0
    %537 = vmatpush1.xpose.msra.mxu0 0.0
    %538 = vmatprep.subr.mxu0 0.0
    %539 = vmatpush1.xpose.msra.mxu0 0.0
    %540 = vmatprep.subr.mxu0 0.0
    %541 = vmatpush1.xpose.msra.mxu0 0.0
    %542 = vmatprep.subr.mxu0 0.0
    %543 = vmatpush1.xpose.msra.mxu0 0.0
    %544 = vmatprep.subr.mxu0 0.0
    %545 = vmatpush1.xpose.msra.mxu0 0.0
    %546 = vmatprep.subr.mxu0 0.0
    %547 = vmatpush1.xpose.msra.mxu0 0.0
    %548 = vmatprep.subr.mxu0 0.0
    %549 = vmatpush1.xpose.msra.mxu0 0.0
    %550 = vmatprep.subr.mxu0 0.0
    %551 = vmatpush1.xpose.msra.mxu0 0.0
    %552 = vmatprep.subr.mxu0 0.0
    %553 = vmatpush1.xpose.msra.mxu0 0.0
    %554 = vmatprep.subr.mxu0 0.0
    %555 = vmatpush1.xpose.msra.mxu0 0.0
    %556 = vmatprep.subr.mxu0 0.0
    %557 = vmatpush1.xpose.msra.mxu0 0.0
    %558 = vmatprep.subr.mxu0 0.0
    %559 = vmatpush1.xpose.msra.mxu0 0.0
    %560 = vmatprep.subr.mxu0 0.0
    %561 = vmatpush1.xpose.msra.mxu0 0.0
    %562 = vmatprep.mubr.f32.mxu0 0.0
    %563 = vmatmul.mubr.f32.gmra.mrb[0].mxu0 %v494
    %v564 = vpop.f32.mrb[0].mxu0
    %v565 = vadd.f32 %v162, %v564
    %v566 = vpop.f32.mrb[0].mxu0
    %567 = vdwg.mxu0
    %568 = vrot.lane.b32.xlu0 %v156, 120
    %v569 = vpop.permute.xlu0 %568
    %570 = vrot.lane.b32.xlu0 %v150, 120
    %v571 = vpop.permute.xlu0 %570
    %v572 = vsel %vm169, %v569, 0
    %v574 = vsel %vm169, %v571, 0
    %576 = vmatprep.subr.mxu0 0.0
    %577 = vmatpush1.xpose.msra.mxu0 %v574
    %578 = vmatprep.subr.mxu0 0.0
    %579 = vmatpush1.xpose.msra.mxu0 0.0
    %580 = vmatprep.subr.mxu0 0.0
    %581 = vmatpush1.xpose.msra.mxu0 0.0
    %582 = vmatprep.subr.mxu0 0.0
    %583 = vmatpush1.xpose.msra.mxu0 0.0
    %584 = vmatprep.subr.mxu0 0.0
    %585 = vmatpush1.xpose.msra.mxu0 0.0
    %586 = vmatprep.subr.mxu0 0.0
    %587 = vmatpush1.xpose.msra.mxu0 0.0
    %588 = vmatprep.subr.mxu0 0.0
    %589 = vmatpush1.xpose.msra.mxu0 0.0
    %590 = vmatprep.subr.mxu0 0.0
    %591 = vmatpush1.xpose.msra.mxu0 0.0
    %592 = vmatprep.subr.mxu0 0.0
    %593 = vmatpush1.xpose.msra.mxu0 0.0
    %594 = vmatprep.subr.mxu0 0.0
    %595 = vmatpush1.xpose.msra.mxu0 0.0
    %596 = vmatprep.subr.mxu0 0.0
    %597 = vmatpush1.xpose.msra.mxu0 0.0
    %598 = vmatprep.subr.mxu0 0.0
    %599 = vmatpush1.xpose.msra.mxu0 0.0
    %600 = vmatprep.subr.mxu0 0.0
    %601 = vmatpush1.xpose.msra.mxu0 0.0
    %602 = vmatprep.subr.mxu0 0.0
    %603 = vmatpush1.xpose.msra.mxu0 0.0
    %604 = vmatprep.subr.mxu0 0.0
    %605 = vmatpush1.xpose.msra.mxu0 0.0
    %606 = vmatprep.subr.mxu0 0.0
    %607 = vmatpush1.xpose.msra.mxu0 0.0
    %608 = vmatprep.subr.mxu0 0.0
    %609 = vmatpush1.xpose.msra.mxu0 0.0
    %610 = vmatprep.subr.mxu0 0.0
    %611 = vmatpush1.xpose.msra.mxu0 0.0
    %612 = vmatprep.subr.mxu0 0.0
    %613 = vmatpush1.xpose.msra.mxu0 0.0
    %614 = vmatprep.subr.mxu0 0.0
    %615 = vmatpush1.xpose.msra.mxu0 0.0
    %616 = vmatprep.subr.mxu0 0.0
    %617 = vmatpush1.xpose.msra.mxu0 0.0
    %618 = vmatprep.subr.mxu0 0.0
    %619 = vmatpush1.xpose.msra.mxu0 0.0
    %620 = vmatprep.subr.mxu0 0.0
    %621 = vmatpush1.xpose.msra.mxu0 0.0
    %622 = vmatprep.subr.mxu0 0.0
    %623 = vmatpush1.xpose.msra.mxu0 0.0
    %624 = vmatprep.subr.mxu0 0.0
    %625 = vmatpush1.xpose.msra.mxu0 0.0
    %626 = vmatprep.subr.mxu0 0.0
    %627 = vmatpush1.xpose.msra.mxu0 0.0
    %628 = vmatprep.subr.mxu0 0.0
    %629 = vmatpush1.xpose.msra.mxu0 0.0
    %630 = vmatprep.subr.mxu0 0.0
    %631 = vmatpush1.xpose.msra.mxu0 0.0
    %632 = vmatprep.subr.mxu0 0.0
    %633 = vmatpush1.xpose.msra.mxu0 0.0
    %634 = vmatprep.subr.mxu0 0.0
    %635 = vmatpush1.xpose.msra.mxu0 0.0
    %636 = vmatprep.subr.mxu0 0.0
    %637 = vmatpush1.xpose.msra.mxu0 0.0
    %638 = vmatprep.subr.mxu0 0.0
    %639 = vmatpush1.xpose.msra.mxu0 0.0
    %640 = vmatprep.mubr.f32.mxu0 0.0
    %641 = vmatmul.mubr.f32.gmra.mrb[0].mxu0 %v572
    %v642 = vpop.f32.mrb[0].mxu0
    %v643 = vadd.f32 %v166, %v642
    %v644 = vpop.f32.mrb[0].mxu0
    %645 = vdwg.mxu0
    %v646 = vsel %vm169, %v565, -inf
    %647 = vmax.xlane.f32.xlu0 %v646
    %v648 = vpop.xlane.xlu0 %647
    %v649 = vsel %vm169, %v643, -inf
    %650 = vmax.xlane.f32.xlu0 %v649
    %v651 = vpop.xlane.xlu0 %650
    %v652 = vsub.f32 %v565, %v648
    %v653 = vsub.f32 %v643, %v651
    %v654 = vmul.f32 %v652, 1.442695
    %v655 = vpow.pop %v654
    %v656 = vmul.f32 %v653, 1.442695
    %v657 = vpow.pop %v656
    %v658 = vsel %vm169, %v655, 0.0
    %659 = vadd.xlane.f32.xlu0 %v658
    %v660 = vpop.xlane.xlu0 %659
    %v661 = vsel %vm169, %v657, 0.0
    %662 = vadd.xlane.f32.xlu0 %v661
    %v663 = vpop.xlane.xlu0 %662
    %v664 = vrcp.pop %v660
    %v665 = vrcp.pop %v663
    %v666 = vmul.f32 %v655, %v664
    %v667 = vmul.f32 %v657, %v665
    %v670 = vsel %vm169, %v666, 0
    %672 = vmatprep.subr.mxu0 0.0
    %673 = vmatpush1.msra.mxu0 %v493
    %674 = vmatprep.subr.mxu0 0.0
    %675 = vmatpush1.msra.mxu0 0.0
    %676 = vmatprep.subr.mxu0 0.0
    %677 = vmatpush1.msra.mxu0 0.0
    %678 = vmatprep.subr.mxu0 0.0
    %679 = vmatpush1.msra.mxu0 0.0
    %680 = vmatprep.subr.mxu0 0.0
    %681 = vmatpush1.msra.mxu0 0.0
    %682 = vmatprep.subr.mxu0 0.0
    %683 = vmatpush1.msra.mxu0 0.0
    %684 = vmatprep.subr.mxu0 0.0
    %685 = vmatpush1.msra.mxu0 0.0
    %686 = vmatprep.subr.mxu0 0.0
    %687 = vmatpush1.msra.mxu0 0.0
    %688 = vmatprep.subr.mxu0 0.0
    %689 = vmatpush1.msra.mxu0 0.0
    %690 = vmatprep.subr.mxu0 0.0
    %691 = vmatpush1.msra.mxu0 0.0
    %692 = vmatprep.subr.mxu0 0.0
    %693 = vmatpush1.msra.mxu0 0.0
    %694 = vmatprep.subr.mxu0 0.0
    %695 = vmatpush1.msra.mxu0 0.0
    %696 = vmatprep.subr.mxu0 0.0
    %697 = vmatpush1.msra.mxu0 0.0
    %698 = vmatprep.subr.mxu0 0.0
    %699 = vmatpush1.msra.mxu0 0.0
    %700 = vmatprep.subr.mxu0 0.0
    %701 = vmatpush1.msra.mxu0 0.0
    %702 = vmatprep.subr.mxu0 0.0
    %703 = vmatpush1.msra.mxu0 0.0
    %704 = vmatprep.subr.mxu0 0.0
    %705 = vmatpush1.msra.mxu0 0.0
    %706 = vmatprep.subr.mxu0 0.0
    %707 = vmatpush1.msra.mxu0 0.0
    %708 = vmatprep.subr.mxu0 0.0
    %709 = vmatpush1.msra.mxu0 0.0
    %710 = vmatprep.subr.mxu0 0.0
    %711 = vmatpush1.msra.mxu0 0.0
    %712 = vmatprep.subr.mxu0 0.0
    %713 = vmatpush1.msra.mxu0 0.0
    %714 = vmatprep.subr.mxu0 0.0
    %715 = vmatpush1.msra.mxu0 0.0
    %716 = vmatprep.subr.mxu0 0.0
    %717 = vmatpush1.msra.mxu0 0.0
    %718 = vmatprep.subr.mxu0 0.0
    %719 = vmatpush1.msra.mxu0 0.0
    %720 = vmatprep.subr.mxu0 0.0
    %721 = vmatpush1.msra.mxu0 0.0
    %722 = vmatprep.subr.mxu0 0.0
    %723 = vmatpush1.msra.mxu0 0.0
    %724 = vmatprep.subr.mxu0 0.0
    %725 = vmatpush1.msra.mxu0 0.0
    %726 = vmatprep.subr.mxu0 0.0
    %727 = vmatpush1.msra.mxu0 0.0
    %728 = vmatprep.subr.mxu0 0.0
    %729 = vmatpush1.msra.mxu0 0.0
    %730 = vmatprep.subr.mxu0 0.0
    %731 = vmatpush1.msra.mxu0 0.0
    %732 = vmatprep.subr.mxu0 0.0
    %733 = vmatpush1.msra.mxu0 0.0
    %734 = vmatprep.subr.mxu0 0.0
    %735 = vmatpush1.msra.mxu0 0.0
    %736 = vmatprep.mubr.f32.mxu0 0.0
    %737 = vmatmul.mubr.f32.gmra.mrb[0].mxu0 %v670
    %v738 = vpop.f32.mrb[0].mxu0
    %v739 = vadd.f32 0.0, %v738
    %v740 = vpop.f32.mrb[0].mxu0
    %741 = vdwg.mxu0
    %v744 = vsel %vm169, %v667, 0
    %746 = vmatprep.subr.mxu0 0.0
    %747 = vmatpush1.msra.mxu0 %v571
    %748 = vmatprep.subr.mxu0 0.0
    %749 = vmatpush1.msra.mxu0 0.0
    %750 = vmatprep.subr.mxu0 0.0
    %751 = vmatpush1.msra.mxu0 0.0
    %752 = vmatprep.subr.mxu0 0.0
    %753 = vmatpush1.msra.mxu0 0.0
    %754 = vmatprep.subr.mxu0 0.0
    %755 = vmatpush1.msra.mxu0 0.0
    %756 = vmatprep.subr.mxu0 0.0
    %757 = vmatpush1.msra.mxu0 0.0
    %758 = vmatprep.subr.mxu0 0.0
    %759 = vmatpush1.msra.mxu0 0.0
    %760 = vmatprep.subr.mxu0 0.0
    %761 = vmatpush1.msra.mxu0 0.0
    %762 = vmatprep.subr.mxu0 0.0
    %763 = vmatpush1.msra.mxu0 0.0
    %764 = vmatprep.subr.mxu0 0.0
    %765 = vmatpush1.msra.mxu0 0.0
    %766 = vmatprep.subr.mxu0 0.0
    %767 = vmatpush1.msra.mxu0 0.0
    %768 = vmatprep.subr.mxu0 0.0
    %769 = vmatpush1.msra.mxu0 0.0
    %770 = vmatprep.subr.mxu0 0.0
    %771 = vmatpush1.msra.mxu0 0.0
    %772 = vmatprep.subr.mxu0 0.0
    %773 = vmatpush1.msra.mxu0 0.0
    %774 = vmatprep.subr.mxu0 0.0
    %775 = vmatpush1.msra.mxu0 0.0
    %776 = vmatprep.subr.mxu0 0.0
    %777 = vmatpush1.msra.mxu0 0.0
    %778 = vmatprep.subr.mxu0 0.0
    %779 = vmatpush1.msra.mxu0 0.0
    %780 = vmatprep.subr.mxu0 0.0
    %781 = vmatpush1.msra.mxu0 0.0
    %782 = vmatprep.subr.mxu0 0.0
    %783 = vmatpush1.msra.mxu0 0.0
    %784 = vmatprep.subr.mxu0 0.0
    %785 = vmatpush1.msra.mxu0 0.0
    %786 = vmatprep.subr.mxu0 0.0
    %787 = vmatpush1.msra.mxu0 0.0
    %788 = vmatprep.subr.mxu0 0.0
    %789 = vmatpush1.msra.mxu0 0.0
    %790 = vmatprep.subr.mxu0 0.0
    %791 = vmatpush1.msra.mxu0 0.0
    %792 = vmatprep.subr.mxu0 0.0
    %793 = vmatpush1.msra.mxu0 0.0
    %794 = vmatprep.subr.mxu0 0.0
    %795 = vmatpush1.msra.mxu0 0.0
    %796 = vmatprep.subr.mxu0 0.0
    %797 = vmatpush1.msra.mxu0 0.0
    %798 = vmatprep.subr.mxu0 0.0
    %799 = vmatpush1.msra.mxu0 0.0
    %800 = vmatprep.subr.mxu0 0.0
    %801 = vmatpush1.msra.mxu0 0.0
    %802 = vmatprep.subr.mxu0 0.0
    %803 = vmatpush1.msra.mxu0 0.0
    %804 = vmatprep.subr.mxu0 0.0
    %805 = vmatpush1.msra.mxu0 0.0
    %806 = vmatprep.subr.mxu0 0.0
    %807 = vmatpush1.msra.mxu0 0.0
    %808 = vmatprep.subr.mxu0 0.0
    %809 = vmatpush1.msra.mxu0 0.0
    %810 = vmatprep.mubr.f32.mxu0 0.0
    %811 = vmatmul.mubr.f32.gmra.mrb[0].mxu0 %v744
    %v812 = vpop.f32.mrb[0].mxu0
    %v813 = vadd.f32 0.0, %v812
    %v814 = vpop.f32.mrb[0].mxu0
    %815 = vdwg.mxu0
    %816 = vrot.lane.b32.xlu0 %v155, 112
    %v817 = vpop.permute.xlu0 %816
    %818 = vrot.lane.b32.xlu0 %v145, 112
    %v819 = vpop.permute.xlu0 %818
    %v820 = vsel %vm169, %v817, 0
    %v822 = vsel %vm169, %v819, 0
    %824 = vmatprep.subr.mxu0 0.0
    %825 = vmatpush1.xpose.msra.mxu0 %v822
    %826 = vmatprep.subr.mxu0 0.0
    %827 = vmatpush1.xpose.msra.mxu0 0.0
    %828 = vmatprep.subr.mxu0 0.0
    %829 = vmatpush1.xpose.msra.mxu0 0.0
    %830 = vmatprep.subr.mxu0 0.0
    %831 = vmatpush1.xpose.msra.mxu0 0.0
    %832 = vmatprep.subr.mxu0 0.0
    %833 = vmatpush1.xpose.msra.mxu0 0.0
    %834 = vmatprep.subr.mxu0 0.0
    %835 = vmatpush1.xpose.msra.mxu0 0.0
    %836 = vmatprep.subr.mxu0 0.0
    %837 = vmatpush1.xpose.msra.mxu0 0.0
    %838 = vmatprep.subr.mxu0 0.0
    %839 = vmatpush1.xpose.msra.mxu0 0.0
    %840 = vmatprep.subr.mxu0 0.0
    %841 = vmatpush1.xpose.msra.mxu0 0.0
    %842 = vmatprep.subr.mxu0 0.0
    %843 = vmatpush1.xpose.msra.mxu0 0.0
    %844 = vmatprep.subr.mxu0 0.0
    %845 = vmatpush1.xpose.msra.mxu0 0.0
    %846 = vmatprep.subr.mxu0 0.0
    %847 = vmatpush1.xpose.msra.mxu0 0.0
    %848 = vmatprep.subr.mxu0 0.0
    %849 = vmatpush1.xpose.msra.mxu0 0.0
    %850 = vmatprep.subr.mxu0 0.0
    %851 = vmatpush1.xpose.msra.mxu0 0.0
    %852 = vmatprep.subr.mxu0 0.0
    %853 = vmatpush1.xpose.msra.mxu0 0.0
    %854 = vmatprep.subr.mxu0 0.0
    %855 = vmatpush1.xpose.msra.mxu0 0.0
    %856 = vmatprep.subr.mxu0 0.0
    %857 = vmatpush1.xpose.msra.mxu0 0.0
    %858 = vmatprep.subr.mxu0 0.0
    %859 = vmatpush1.xpose.msra.mxu0 0.0
    %860 = vmatprep.subr.mxu0 0.0
    %861 = vmatpush1.xpose.msra.mxu0 0.0
    %862 = vmatprep.subr.mxu0 0.0
    %863 = vmatpush1.xpose.msra.mxu0 0.0
    %864 = vmatprep.subr.mxu0 0.0
    %865 = vmatpush1.xpose.msra.mxu0 0.0
    %866 = vmatprep.subr.mxu0 0.0
    %867 = vmatpush1.xpose.msra.mxu0 0.0
    %868 = vmatprep.subr.mxu0 0.0
    %869 = vmatpush1.xpose.msra.mxu0 0.0
    %870 = vmatprep.subr.mxu0 0.0
    %871 = vmatpush1.xpose.msra.mxu0 0.0
    %872 = vmatprep.subr.mxu0 0.0
    %873 = vmatpush1.xpose.msra.mxu0 0.0
    %874 = vmatprep.subr.mxu0 0.0
    %875 = vmatpush1.xpose.msra.mxu0 0.0
    %876 = vmatprep.subr.mxu0 0.0
    %877 = vmatpush1.xpose.msra.mxu0 0.0
    %878 = vmatprep.subr.mxu0 0.0
    %879 = vmatpush1.xpose.msra.mxu0 0.0
    %880 = vmatprep.subr.mxu0 0.0
    %881 = vmatpush1.xpose.msra.mxu0 0.0
    %882 = vmatprep.subr.mxu0 0.0
    %883 = vmatpush1.xpose.msra.mxu0 0.0
    %884 = vmatprep.subr.mxu0 0.0
    %885 = vmatpush1.xpose.msra.mxu0 0.0
    %886 = vmatprep.subr.mxu0 0.0
    %887 = vmatpush1.xpose.msra.mxu0 0.0
    %888 = vmatprep.mubr.f32.mxu0 0.0
    %889 = vmatmul.mubr.f32.gmra.mrb[0].mxu0 %v820
    %v890 = vpop.f32.mrb[0].mxu0
    %v891 = vadd.f32 %v162, %v890
    %v892 = vpop.f32.mrb[0].mxu0
    %893 = vdwg.mxu0
    %894 = vrot.lane.b32.xlu0 %v156, 112
    %v895 = vpop.permute.xlu0 %894
    %896 = vrot.lane.b32.xlu0 %v150, 112
    %v897 = vpop.permute.xlu0 %896
    %v898 = vsel %vm169, %v895, 0
    %v900 = vsel %vm169, %v897, 0
    %902 = vmatprep.subr.mxu0 0.0
    %903 = vmatpush1.xpose.msra.mxu0 %v900
    %904 = vmatprep.subr.mxu0 0.0
    %905 = vmatpush1.xpose.msra.mxu0 0.0
    %906 = vmatprep.subr.mxu0 0.0
    %907 = vmatpush1.xpose.msra.mxu0 0.0
    %908 = vmatprep.subr.mxu0 0.0
    %909 = vmatpush1.xpose.msra.mxu0 0.0
    %910 = vmatprep.subr.mxu0 0.0
    %911 = vmatpush1.xpose.msra.mxu0 0.0
    %912 = vmatprep.subr.mxu0 0.0
    %913 = vmatpush1.xpose.msra.mxu0 0.0
    %914 = vmatprep.subr.mxu0 0.0
    %915 = vmatpush1.xpose.msra.mxu0 0.0
    %916 = vmatprep.subr.mxu0 0.0
    %917 = vmatpush1.xpose.msra.mxu0 0.0
    %918 = vmatprep.subr.mxu0 0.0
    %919 = vmatpush1.xpose.msra.mxu0 0.0
    %920 = vmatprep.subr.mxu0 0.0
    %921 = vmatpush1.xpose.msra.mxu0 0.0
    %922 = vmatprep.subr.mxu0 0.0
    %923 = vmatpush1.xpose.msra.mxu0 0.0
    %924 = vmatprep.subr.mxu0 0.0
    %925 = vmatpush1.xpose.msra.mxu0 0.0
    %926 = vmatprep.subr.mxu0 0.0
    %927 = vmatpush1.xpose.msra.mxu0 0.0
    %928 = vmatprep.subr.mxu0 0.0
    %929 = vmatpush1.xpose.msra.mxu0 0.0
    %930 = vmatprep.subr.mxu0 0.0
    %931 = vmatpush1.xpose.msra.mxu0 0.0
    %932 = vmatprep.subr.mxu0 0.0
    %933 = vmatpush1.xpose.msra.mxu0 0.0
    %934 = vmatprep.subr.mxu0 0.0
    %935 = vmatpush1.xpose.msra.mxu0 0.0
    %936 = vmatprep.subr.mxu0 0.0
    %937 = vmatpush1.xpose.msra.mxu0 0.0
    %938 = vmatprep.subr.mxu0 0.0
    %939 = vmatpush1.xpose.msra.mxu0 0.0
    %940 = vmatprep.subr.mxu0 0.0
    %941 = vmatpush1.xpose.msra.mxu0 0.0
    %942 = vmatprep.subr.mxu0 0.0
    %943 = vmatpush1.xpose.msra.mxu0 0.0
    %944 = vmatprep.subr.mxu0 0.0
    %945 = vmatpush1.xpose.msra.mxu0 0.0
    %946 = vmatprep.subr.mxu0 0.0
    %947 = vmatpush1.xpose.msra.mxu0 0.0
    %948 = vmatprep.subr.mxu0 0.0
    %949 = vmatpush1.xpose.msra.mxu0 0.0
    %950 = vmatprep.subr.mxu0 0.0
    %951 = vmatpush1.xpose.msra.mxu0 0.0
    %952 = vmatprep.subr.mxu0 0.0
    %953 = vmatpush1.xpose.msra.mxu0 0.0
    %954 = vmatprep.subr.mxu0 0.0
    %955 = vmatpush1.xpose.msra.mxu0 0.0
    %956 = vmatprep.subr.mxu0 0.0
    %957 = vmatpush1.xpose.msra.mxu0 0.0
    %958 = vmatprep.subr.mxu0 0.0
    %959 = vmatpush1.xpose.msra.mxu0 0.0
    %960 = vmatprep.subr.mxu0 0.0
    %961 = vmatpush1.xpose.msra.mxu0 0.0
    %962 = vmatprep.subr.mxu0 0.0
    %963 = vmatpush1.xpose.msra.mxu0 0.0
    %964 = vmatprep.subr.mxu0 0.0
    %965 = vmatpush1.xpose.msra.mxu0 0.0
    %966 = vmatprep.mubr.f32.mxu0 0.0
    %967 = vmatmul.mubr.f32.gmra.mrb[0].mxu0 %v898
    %v968 = vpop.f32.mrb[0].mxu0
    %v969 = vadd.f32 %v166, %v968
    %v970 = vpop.f32.mrb[0].mxu0
    %971 = vdwg.mxu0
    %v972 = vsel %vm169, %v891, -inf
    %973 = vmax.xlane.f32.xlu0 %v972
    %v974 = vpop.xlane.xlu0 %973
    %v975 = vsel %vm169, %v969, -inf
    %976 = vmax.xlane.f32.xlu0 %v975
    %v977 = vpop.xlane.xlu0 %976
    %v978 = vsub.f32 %v891, %v974
    %v979 = vsub.f32 %v969, %v977
    %v980 = vmul.f32 %v978, 1.442695
    %v981 = vpow.pop %v980
    %v982 = vmul.f32 %v979, 1.442695
    %v983 = vpow.pop %v982
    %v984 = vsel %vm169, %v981, 0.0
    %985 = vadd.xlane.f32.xlu0 %v984
    %v986 = vpop.xlane.xlu0 %985
    %v987 = vsel %vm169, %v983, 0.0
    %988 = vadd.xlane.f32.xlu0 %v987
    %v989 = vpop.xlane.xlu0 %988
    %v990 = vrcp.pop %v986
    %v991 = vrcp.pop %v989
    %v992 = vmul.f32 %v981, %v990
    %v993 = vmul.f32 %v983, %v991
    %v996 = vsel %vm169, %v992, 0
    %998 = vmatprep.subr.mxu0 0.0
    %999 = vmatpush1.msra.mxu0 %v819
    %1000 = vmatprep.subr.mxu0 0.0
    %1001 = vmatpush1.msra.mxu0 0.0
    %1002 = vmatprep.subr.mxu0 0.0
    %1003 = vmatpush1.msra.mxu0 0.0
    %1004 = vmatprep.subr.mxu0 0.0
    %1005 = vmatpush1.msra.mxu0 0.0
    %1006 = vmatprep.subr.mxu0 0.0
    %1007 = vmatpush1.msra.mxu0 0.0
    %1008 = vmatprep.subr.mxu0 0.0
    %1009 = vmatpush1.msra.mxu0 0.0
    %1010 = vmatprep.subr.mxu0 0.0
    %1011 = vmatpush1.msra.mxu0 0.0
    %1012 = vmatprep.subr.mxu0 0.0
    %1013 = vmatpush1.msra.mxu0 0.0
    %1014 = vmatprep.subr.mxu0 0.0
    %1015 = vmatpush1.msra.mxu0 0.0
    %1016 = vmatprep.subr.mxu0 0.0
    %1017 = vmatpush1.msra.mxu0 0.0
    %1018 = vmatprep.subr.mxu0 0.0
    %1019 = vmatpush1.msra.mxu0 0.0
    %1020 = vmatprep.subr.mxu0 0.0
    %1021 = vmatpush1.msra.mxu0 0.0
    %1022 = vmatprep.subr.mxu0 0.0
    %1023 = vmatpush1.msra.mxu0 0.0
    %1024 = vmatprep.subr.mxu0 0.0
    %1025 = vmatpush1.msra.mxu0 0.0
    %1026 = vmatprep.subr.mxu0 0.0
    %1027 = vmatpush1.msra.mxu0 0.0
    %1028 = vmatprep.subr.mxu0 0.0
    %1029 = vmatpush1.msra.mxu0 0.0
    %1030 = vmatprep.subr.mxu0 0.0
    %1031 = vmatpush1.msra.mxu0 0.0
    %1032 = vmatprep.subr.mxu0 0.0
    %1033 = vmatpush1.msra.mxu0 0.0
    %1034 = vmatprep.subr.mxu0 0.0
    %1035 = vmatpush1.msra.mxu0 0.0
    %1036 = vmatprep.subr.mxu0 0.0
    %1037 = vmatpush1.msra.mxu0 0.0
    %1038 = vmatprep.subr.mxu0 0.0
    %1039 = vmatpush1.msra.mxu0 0.0
    %1040 = vmatprep.subr.mxu0 0.0
    %1041 = vmatpush1.msra.mxu0 0.0
    %1042 = vmatprep.subr.mxu0 0.0
    %1043 = vmatpush1.msra.mxu0 0.0
    %1044 = vmatprep.subr.mxu0 0.0
    %1045 = vmatpush1.msra.mxu0 0.0
    %1046 = vmatprep.subr.mxu0 0.0
    %1047 = vmatpush1.msra.mxu0 0.0
    %1048 = vmatprep.subr.mxu0 0.0
    %1049 = vmatpush1.msra.mxu0 0.0
    %1050 = vmatprep.subr.mxu0 0.0
    %1051 = vmatpush1.msra.mxu0 0.0
    %1052 = vmatprep.subr.mxu0 0.0
    %1053 = vmatpush1.msra.mxu0 0.0
    %1054 = vmatprep.subr.mxu0 0.0
    %1055 = vmatpush1.msra.mxu0 0.0
    %1056 = vmatprep.subr.mxu0 0.0
    %1057 = vmatpush1.msra.mxu0 0.0
    %1058 = vmatprep.subr.mxu0 0.0
    %1059 = vmatpush1.msra.mxu0 0.0
    %1060 = vmatprep.subr.mxu0 0.0
    %1061 = vmatpush1.msra.mxu0 0.0
    %1062 = vmatprep.mubr.f32.mxu0 0.0
    %1063 = vmatmul.mubr.f32.gmra.mrb[0].mxu0 %v996
    %v1064 = vpop.f32.mrb[0].mxu0
    %v1065 = vadd.f32 0.0, %v1064
    %v1066 = vpop.f32.mrb[0].mxu0
    %1067 = vdwg.mxu0
    %v1070 = vsel %vm169, %v993, 0
    %1072 = vmatprep.subr.mxu0 0.0
    %1073 = vmatpush1.msra.mxu0 %v897
    %1074 = vmatprep.subr.mxu0 0.0
    %1075 = vmatpush1.msra.mxu0 0.0
    %1076 = vmatprep.subr.mxu0 0.0
    %1077 = vmatpush1.msra.mxu0 0.0
    %1078 = vmatprep.subr.mxu0 0.0
    %1079 = vmatpush1.msra.mxu0 0.0
    %1080 = vmatprep.subr.mxu0 0.0
    %1081 = vmatpush1.msra.mxu0 0.0
    %1082 = vmatprep.subr.mxu0 0.0
    %1083 = vmatpush1.msra.mxu0 0.0
    %1084 = vmatprep.subr.mxu0 0.0
    %1085 = vmatpush1.msra.mxu0 0.0
    %1086 = vmatprep.subr.mxu0 0.0
    %1087 = vmatpush1.msra.mxu0 0.0
    %1088 = vmatprep.subr.mxu0 0.0
    %1089 = vmatpush1.msra.mxu0 0.0
    %1090 = vmatprep.subr.mxu0 0.0
    %1091 = vmatpush1.msra.mxu0 0.0
    %1092 = vmatprep.subr.mxu0 0.0
    %1093 = vmatpush1.msra.mxu0 0.0
    %1094 = vmatprep.subr.mxu0 0.0
    %1095 = vmatpush1.msra.mxu0 0.0
    %1096 = vmatprep.subr.mxu0 0.0
    %1097 = vmatpush1.msra.mxu0 0.0
    %1098 = vmatprep.subr.mxu0 0.0
    %1099 = vmatpush1.msra.mxu0 0.0
    %1100 = vmatprep.subr.mxu0 0.0
    %1101 = vmatpush1.msra.mxu0 0.0
    %1102 = vmatprep.subr.mxu0 0.0
    %1103 = vmatpush1.msra.mxu0 0.0
    %1104 = vmatprep.subr.mxu0 0.0
    %1105 = vmatpush1.msra.mxu0 0.0
    %1106 = vmatprep.subr.mxu0 0.0
    %1107 = vmatpush1.msra.mxu0 0.0
    %1108 = vmatprep.subr.mxu0 0.0
    %1109 = vmatpush1.msra.mxu0 0.0
    %1110 = vmatprep.subr.mxu0 0.0
    %1111 = vmatpush1.msra.mxu0 0.0
    %1112 = vmatprep.subr.mxu0 0.0
    %1113 = vmatpush1.msra.mxu0 0.0
    %1114 = vmatprep.subr.mxu0 0.0
    %1115 = vmatpush1.msra.mxu0 0.0
    %1116 = vmatprep.subr.mxu0 0.0
    %1117 = vmatpush1.msra.mxu0 0.0
    %1118 = vmatprep.subr.mxu0 0.0
    %1119 = vmatpush1.msra.mxu0 0.0
    %1120 = vmatprep.subr.mxu0 0.0
    %1121 = vmatpush1.msra.mxu0 0.0
    %1122 = vmatprep.subr.mxu0 0.0
    %1123 = vmatpush1.msra.mxu0 0.0
    %1124 = vmatprep.subr.mxu0 0.0
    %1125 = vmatpush1.msra.mxu0 0.0
    %1126 = vmatprep.subr.mxu0 0.0
    %1127 = vmatpush1.msra.mxu0 0.0
    %1128 = vmatprep.subr.mxu0 0.0
    %1129 = vmatpush1.msra.mxu0 0.0
    %1130 = vmatprep.subr.mxu0 0.0
    %1131 = vmatpush1.msra.mxu0 0.0
    %1132 = vmatprep.subr.mxu0 0.0
    %1133 = vmatpush1.msra.mxu0 0.0
    %1134 = vmatprep.subr.mxu0 0.0
    %1135 = vmatpush1.msra.mxu0 0.0
    %1136 = vmatprep.mubr.f32.mxu0 0.0
    %1137 = vmatmul.mubr.f32.gmra.mrb[0].mxu0 %v1070
    %v1138 = vpop.f32.mrb[0].mxu0
    %v1139 = vadd.f32 0.0, %v1138
    %v1140 = vpop.f32.mrb[0].mxu0
    %1141 = vdwg.mxu0
    %1142 = vrot.lane.b32.xlu0 %v155, 104
    %v1143 = vpop.permute.xlu0 %1142
    %1144 = vrot.lane.b32.xlu0 %v145, 104
    %v1145 = vpop.permute.xlu0 %1144
    %v1146 = vsel %vm169, %v1143, 0
    %v1148 = vsel %vm169, %v1145, 0
    %1150 = vmatprep.subr.mxu0 0.0
    %1151 = vmatpush1.xpose.msra.mxu0 %v1148
    %1152 = vmatprep.subr.mxu0 0.0
    %1153 = vmatpush1.xpose.msra.mxu0 0.0
    %1154 = vmatprep.subr.mxu0 0.0
    %1155 = vmatpush1.xpose.msra.mxu0 0.0
    %1156 = vmatprep.subr.mxu0 0.0
    %1157 = vmatpush1.xpose.msra.mxu0 0.0
    %1158 = vmatprep.subr.mxu0 0.0
    %1159 = vmatpush1.xpose.msra.mxu0 0.0
    %1160 = vmatprep.subr.mxu0 0.0
    %1161 = vmatpush1.xpose.msra.mxu0 0.0
    %1162 = vmatprep.subr.mxu0 0.0
    %1163 = vmatpush1.xpose.msra.mxu0 0.0
    %1164 = vmatprep.subr.mxu0 0.0
    %1165 = vmatpush1.xpose.msra.mxu0 0.0
    %1166 = vmatprep.subr.mxu0 0.0
    %1167 = vmatpush1.xpose.msra.mxu0 0.0
    %1168 = vmatprep.subr.mxu0 0.0
    %1169 = vmatpush1.xpose.msra.mxu0 0.0
    %1170 = vmatprep.subr.mxu0 0.0
    %1171 = vmatpush1.xpose.msra.mxu0 0.0
    %1172 = vmatprep.subr.mxu0 0.0
    %1173 = vmatpush1.xpose.msra.mxu0 0.0
    %1174 = vmatprep.subr.mxu0 0.0
    %1175 = vmatpush1.xpose.msra.mxu0 0.0
    %1176 = vmatprep.subr.mxu0 0.0
    %1177 = vmatpush1.xpose.msra.mxu0 0.0
    %1178 = vmatprep.subr.mxu0 0.0
    %1179 = vmatpush1.xpose.msra.mxu0 0.0
    %1180 = vmatprep.subr.mxu0 0.0
    %1181 = vmatpush1.xpose.msra.mxu0 0.0
    %1182 = vmatprep.subr.mxu0 0.0
    %1183 = vmatpush1.xpose.msra.mxu0 0.0
    %1184 = vmatprep.subr.mxu0 0.0
    %1185 = vmatpush1.xpose.msra.mxu0 0.0
    %1186 = vmatprep.subr.mxu0 0.0
    %1187 = vmatpush1.xpose.msra.mxu0 0.0
    %1188 = vmatprep.subr.mxu0 0.0
    %1189 = vmatpush1.xpose.msra.mxu0 0.0
    %1190 = vmatprep.subr.mxu0 0.0
    %1191 = vmatpush1.xpose.msra.mxu0 0.0
    %1192 = vmatprep.subr.mxu0 0.0
    %1193 = vmatpush1.xpose.msra.mxu0 0.0
    %1194 = vmatprep.subr.mxu0 0.0
    %1195 = vmatpush1.xpose.msra.mxu0 0.0
    %1196 = vmatprep.subr.mxu0 0.0
    %1197 = vmatpush1.xpose.msra.mxu0 0.0
    %1198 = vmatprep.subr.mxu0 0.0
    %1199 = vmatpush1.xpose.msra.mxu0 0.0
    %1200 = vmatprep.subr.mxu0 0.0
    %1201 = vmatpush1.xpose.msra.mxu0 0.0
    %1202 = vmatprep.subr.mxu0 0.0
    %1203 = vmatpush1.xpose.msra.mxu0 0.0
    %1204 = vmatprep.subr.mxu0 0.0
    %1205 = vmatpush1.xpose.msra.mxu0 0.0
    %1206 = vmatprep.subr.mxu0 0.0
    %1207 = vmatpush1.xpose.msra.mxu0 0.0
    %1208 = vmatprep.subr.mxu0 0.0
    %1209 = vmatpush1.xpose.msra.mxu0 0.0
    %1210 = vmatprep.subr.mxu0 0.0
    %1211 = vmatpush1.xpose.msra.mxu0 0.0
    %1212 = vmatprep.subr.mxu0 0.0
    %1213 = vmatpush1.xpose.msra.mxu0 0.0
    %1214 = vmatprep.mubr.f32.mxu0 0.0
    %1215 = vmatmul.mubr.f32.gmra.mrb[0].mxu0 %v1146
    %v1216 = vpop.f32.mrb[0].mxu0
    %v1217 = vadd.f32 %v162, %v1216
    %v1218 = vpop.f32.mrb[0].mxu0
    %1219 = vdwg.mxu0
    %1220 = vrot.lane.b32.xlu0 %v156, 104
    %v1221 = vpop.permute.xlu0 %1220
    %1222 = vrot.lane.b32.xlu0 %v150, 104
    %v1223 = vpop.permute.xlu0 %1222
    %v1224 = vsel %vm169, %v1221, 0
    %v1226 = vsel %vm169, %v1223, 0
    %1228 = vmatprep.subr.mxu0 0.0
    %1229 = vmatpush1.xpose.msra.mxu0 %v1226
    %1230 = vmatprep.subr.mxu0 0.0
    %1231 = vmatpush1.xpose.msra.mxu0 0.0
    %1232 = vmatprep.subr.mxu0 0.0
    %1233 = vmatpush1.xpose.msra.mxu0 0.0
    %1234 = vmatprep.subr.mxu0 0.0
    %1235 = vmatpush1.xpose.msra.mxu0 0.0
    %1236 = vmatprep.subr.mxu0 0.0
    %1237 = vmatpush1.xpose.msra.mxu0 0.0
    %1238 = vmatprep.subr.mxu0 0.0
    %1239 = vmatpush1.xpose.msra.mxu0 0.0
    %1240 = vmatprep.subr.mxu0 0.0
    %1241 = vmatpush1.xpose.msra.mxu0 0.0
    %1242 = vmatprep.subr.mxu0 0.0
    %1243 = vmatpush1.xpose.msra.mxu0 0.0
    %1244 = vmatprep.subr.mxu0 0.0
    %1245 = vmatpush1.xpose.msra.mxu0 0.0
    %1246 = vmatprep.subr.mxu0 0.0
    %1247 = vmatpush1.xpose.msra.mxu0 0.0
    %1248 = vmatprep.subr.mxu0 0.0
    %1249 = vmatpush1.xpose.msra.mxu0 0.0
    %1250 = vmatprep.subr.mxu0 0.0
    %1251 = vmatpush1.xpose.msra.mxu0 0.0
    %1252 = vmatprep.subr.mxu0 0.0
    %1253 = vmatpush1.xpose.msra.mxu0 0.0
    %1254 = vmatprep.subr.mxu0 0.0
    %1255 = vmatpush1.xpose.msra.mxu0 0.0
    %1256 = vmatprep.subr.mxu0 0.0
    %1257 = vmatpush1.xpose.msra.mxu0 0.0
    %1258 = vmatprep.subr.mxu0 0.0
    %1259 = vmatpush1.xpose.msra.mxu0 0.0
    %1260 = vmatprep.subr.mxu0 0.0
    %1261 = vmatpush1.xpose.msra.mxu0 0.0
    %1262 = vmatprep.subr.mxu0 0.0
    %1263 = vmatpush1.xpose.msra.mxu0 0.0
    %1264 = vmatprep.subr.mxu0 0.0
    %1265 = vmatpush1.xpose.msra.mxu0 0.0
    %1266 = vmatprep.subr.mxu0 0.0
    %1267 = vmatpush1.xpose.msra.mxu0 0.0
    %1268 = vmatprep.subr.mxu0 0.0
    %1269 = vmatpush1.xpose.msra.mxu0 0.0
    %1270 = vmatprep.subr.mxu0 0.0
    %1271 = vmatpush1.xpose.msra.mxu0 0.0
    %1272 = vmatprep.subr.mxu0 0.0
    %1273 = vmatpush1.xpose.msra.mxu0 0.0
    %1274 = vmatprep.subr.mxu0 0.0
    %1275 = vmatpush1.xpose.msra.mxu0 0.0
    %1276 = vmatprep.subr.mxu0 0.0
    %1277 = vmatpush1.xpose.msra.mxu0 0.0
    %1278 = vmatprep.subr.mxu0 0.0
    %1279 = vmatpush1.xpose.msra.mxu0 0.0
    %1280 = vmatprep.subr.mxu0 0.0
    %1281 = vmatpush1.xpose.msra.mxu0 0.0
    %1282 = vmatprep.subr.mxu0 0.0
    %1283 = vmatpush1.xpose.msra.mxu0 0.0
    %1284 = vmatprep.subr.mxu0 0.0
    %1285 = vmatpush1.xpose.msra.mxu0 0.0
    %1286 = vmatprep.subr.mxu0 0.0
    %1287 = vmatpush1.xpose.msra.mxu0 0.0
    %1288 = vmatprep.subr.mxu0 0.0
    %1289 = vmatpush1.xpose.msra.mxu0 0.0
    %1290 = vmatprep.subr.mxu0 0.0
    %1291 = vmatpush1.xpose.msra.mxu0 0.0
    %1292 = vmatprep.mubr.f32.mxu0 0.0
    %1293 = vmatmul.mubr.f32.gmra.mrb[0].mxu0 %v1224
    %v1294 = vpop.f32.mrb[0].mxu0
    %v1295 = vadd.f32 %v166, %v1294
    %v1296 = vpop.f32.mrb[0].mxu0
    %1297 = vdwg.mxu0
    %v1298 = vsel %vm169, %v1217, -inf
    %1299 = vmax.xlane.f32.xlu0 %v1298
    %v1300 = vpop.xlane.xlu0 %1299
    %v1301 = vsel %vm169, %v1295, -inf
    %1302 = vmax.xlane.f32.xlu0 %v1301
    %v1303 = vpop.xlane.xlu0 %1302
    %v1304 = vsub.f32 %v1217, %v1300
    %v1305 = vsub.f32 %v1295, %v1303
    %v1306 = vmul.f32 %v1304, 1.442695
    %v1307 = vpow.pop %v1306
    %v1308 = vmul.f32 %v1305, 1.442695
    %v1309 = vpow.pop %v1308
    %v1310 = vsel %vm169, %v1307, 0.0
    %1311 = vadd.xlane.f32.xlu0 %v1310
    %v1312 = vpop.xlane.xlu0 %1311
    %v1313 = vsel %vm169, %v1309, 0.0
    %1314 = vadd.xlane.f32.xlu0 %v1313
    %v1315 = vpop.xlane.xlu0 %1314
    %v1316 = vrcp.pop %v1312
    %v1317 = vrcp.pop %v1315
    %v1318 = vmul.f32 %v1307, %v1316
    %v1319 = vmul.f32 %v1309, %v1317
    %v1322 = vsel %vm169, %v1318, 0
    %1324 = vmatprep.subr.mxu0 0.0
    %1325 = vmatpush1.msra.mxu0 %v1145
    %1326 = vmatprep.subr.mxu0 0.0
    %1327 = vmatpush1.msra.mxu0 0.0
    %1328 = vmatprep.subr.mxu0 0.0
    %1329 = vmatpush1.msra.mxu0 0.0
    %1330 = vmatprep.subr.mxu0 0.0
    %1331 = vmatpush1.msra.mxu0 0.0
    %1332 = vmatprep.subr.mxu0 0.0
    %1333 = vmatpush1.msra.mxu0 0.0
    %1334 = vmatprep.subr.mxu0 0.0
    %1335 = vmatpush1.msra.mxu0 0.0
    %1336 = vmatprep.subr.mxu0 0.0
    %1337 = vmatpush1.msra.mxu0 0.0
    %1338 = vmatprep.subr.mxu0 0.0
    %1339 = vmatpush1.msra.mxu0 0.0
    %1340 = vmatprep.subr.mxu0 0.0
    %1341 = vmatpush1.msra.mxu0 0.0
    %1342 = vmatprep.subr.mxu0 0.0
    %1343 = vmatpush1.msra.mxu0 0.0
    %1344 = vmatprep.subr.mxu0 0.0
    %1345 = vmatpush1.msra.mxu0 0.0
    %1346 = vmatprep.subr.mxu0 0.0
    %1347 = vmatpush1.msra.mxu0 0.0
    %1348 = vmatprep.subr.mxu0 0.0
    %1349 = vmatpush1.msra.mxu0 0.0
    %1350 = vmatprep.subr.mxu0 0.0
    %1351 = vmatpush1.msra.mxu0 0.0
    %1352 = vmatprep.subr.mxu0 0.0
    %1353 = vmatpush1.msra.mxu0 0.0
    %1354 = vmatprep.subr.mxu0 0.0
    %1355 = vmatpush1.msra.mxu0 0.0
    %1356 = vmatprep.subr.mxu0 0.0
    %1357 = vmatpush1.msra.mxu0 0.0
    %1358 = vmatprep.subr.mxu0 0.0
    %1359 = vmatpush1.msra.mxu0 0.0
    %1360 = vmatprep.subr.mxu0 0.0
    %1361 = vmatpush1.msra.mxu0 0.0
    %1362 = vmatprep.subr.mxu0 0.0
    %1363 = vmatpush1.msra.mxu0 0.0
    %1364 = vmatprep.subr.mxu0 0.0
    %1365 = vmatpush1.msra.mxu0 0.0
    %1366 = vmatprep.subr.mxu0 0.0
    %1367 = vmatpush1.msra.mxu0 0.0
    %1368 = vmatprep.subr.mxu0 0.0
    %1369 = vmatpush1.msra.mxu0 0.0
    %1370 = vmatprep.subr.mxu0 0.0
    %1371 = vmatpush1.msra.mxu0 0.0
    %1372 = vmatprep.subr.mxu0 0.0
    %1373 = vmatpush1.msra.mxu0 0.0
    %1374 = vmatprep.subr.mxu0 0.0
    %1375 = vmatpush1.msra.mxu0 0.0
    %1376 = vmatprep.subr.mxu0 0.0
    %1377 = vmatpush1.msra.mxu0 0.0
    %1378 = vmatprep.subr.mxu0 0.0
    %1379 = vmatpush1.msra.mxu0 0.0
    %1380 = vmatprep.subr.mxu0 0.0
    %1381 = vmatpush1.msra.mxu0 0.0
    %1382 = vmatprep.subr.mxu0 0.0
    %1383 = vmatpush1.msra.mxu0 0.0
    %1384 = vmatprep.subr.mxu0 0.0
    %1385 = vmatpush1.msra.mxu0 0.0
    %1386 = vmatprep.subr.mxu0 0.0
    %1387 = vmatpush1.msra.mxu0 0.0
    %1388 = vmatprep.mubr.f32.mxu0 0.0
    %1389 = vmatmul.mubr.f32.gmra.mrb[0].mxu0 %v1322
    %v1390 = vpop.f32.mrb[0].mxu0
    %v1391 = vadd.f32 0.0, %v1390
    %v1392 = vpop.f32.mrb[0].mxu0
    %1393 = vdwg.mxu0
    %v1396 = vsel %vm169, %v1319, 0
    %1398 = vmatprep.subr.mxu0 0.0
    %1399 = vmatpush1.msra.mxu0 %v1223
    %1400 = vmatprep.subr.mxu0 0.0
    %1401 = vmatpush1.msra.mxu0 0.0
    %1402 = vmatprep.subr.mxu0 0.0
    %1403 = vmatpush1.msra.mxu0 0.0
    %1404 = vmatprep.subr.mxu0 0.0
    %1405 = vmatpush1.msra.mxu0 0.0
    %1406 = vmatprep.subr.mxu0 0.0
    %1407 = vmatpush1.msra.mxu0 0.0
    %1408 = vmatprep.subr.mxu0 0.0
    %1409 = vmatpush1.msra.mxu0 0.0
    %1410 = vmatprep.subr.mxu0 0.0
    %1411 = vmatpush1.msra.mxu0 0.0
    %1412 = vmatprep.subr.mxu0 0.0
    %1413 = vmatpush1.msra.mxu0 0.0
    %1414 = vmatprep.subr.mxu0 0.0
    %1415 = vmatpush1.msra.mxu0 0.0
    %1416 = vmatprep.subr.mxu0 0.0
    %1417 = vmatpush1.msra.mxu0 0.0
    %1418 = vmatprep.subr.mxu0 0.0
    %1419 = vmatpush1.msra.mxu0 0.0
    %1420 = vmatprep.subr.mxu0 0.0
    %1421 = vmatpush1.msra.mxu0 0.0
    %1422 = vmatprep.subr.mxu0 0.0
    %1423 = vmatpush1.msra.mxu0 0.0
    %1424 = vmatprep.subr.mxu0 0.0
    %1425 = vmatpush1.msra.mxu0 0.0
    %1426 = vmatprep.subr.mxu0 0.0
    %1427 = vmatpush1.msra.mxu0 0.0
    %1428 = vmatprep.subr.mxu0 0.0
    %1429 = vmatpush1.msra.mxu0 0.0
    %1430 = vmatprep.subr.mxu0 0.0
    %1431 = vmatpush1.msra.mxu0 0.0
    %1432 = vmatprep.subr.mxu0 0.0
    %1433 = vmatpush1.msra.mxu0 0.0
    %1434 = vmatprep.subr.mxu0 0.0
    %1435 = vmatpush1.msra.mxu0 0.0
    %1436 = vmatprep.subr.mxu0 0.0
    %1437 = vmatpush1.msra.mxu0 0.0
    %1438 = vmatprep.subr.mxu0 0.0
    %1439 = vmatpush1.msra.mxu0 0.0
    %1440 = vmatprep.subr.mxu0 0.0
    %1441 = vmatpush1.msra.mxu0 0.0
    %1442 = vmatprep.subr.mxu0 0.0
    %1443 = vmatpush1.msra.mxu0 0.0
    %1444 = vmatprep.subr.mxu0 0.0
    %1445 = vmatpush1.msra.mxu0 0.0
    %1446 = vmatprep.subr.mxu0 0.0
    %1447 = vmatpush1.msra.mxu0 0.0
    %1448 = vmatprep.subr.mxu0 0.0
    %1449 = vmatpush1.msra.mxu0 0.0
    %1450 = vmatprep.subr.mxu0 0.0
    %1451 = vmatpush1.msra.mxu0 0.0
    %1452 = vmatprep.subr.mxu0 0.0
    %1453 = vmatpush1.msra.mxu0 0.0
    %1454 = vmatprep.subr.mxu0 0.0
    %1455 = vmatpush1.msra.mxu0 0.0
    %1456 = vmatprep.subr.mxu0 0.0
    %1457 = vmatpush1.msra.mxu0 0.0
    %1458 = vmatprep.subr.mxu0 0.0
    %1459 = vmatpush1.msra.mxu0 0.0
    %1460 = vmatprep.subr.mxu0 0.0
    %1461 = vmatpush1.msra.mxu0 0.0
    %1462 = vmatprep.mubr.f32.mxu0 0.0
    %1463 = vmatmul.mubr.f32.gmra.mrb[0].mxu0 %v1396
    %v1464 = vpop.f32.mrb[0].mxu0
    %v1465 = vadd.f32 0.0, %v1464
    %v1466 = vpop.f32.mrb[0].mxu0
    %1467 = vdwg.mxu0
    %1470 = vrot.lane.b32.xlu0 %v739, 8
    %v1471 = vpop.permute.xlu0 %1470
    %1472 = vrot.lane.b32.xlu0 %v813, 8
    %v1473 = vpop.permute.xlu0 %1472
    %1478 = vrot.lane.b32.xlu0 %v1065, 16
    %v1479 = vpop.permute.xlu0 %1478
    %1480 = vrot.lane.b32.xlu0 %v1139, 16
    %v1481 = vpop.permute.xlu0 %1480
    %1486 = vrot.lane.b32.xlu0 %v1391, 24
    %v1487 = vpop.permute.xlu0 %1486
    %1488 = vrot.lane.b32.xlu0 %v1465, 24
    %v1489 = vpop.permute.xlu0 %1488
    %v1492 = vsel %vm169, %v414, %v1471
    %v1493 = vsel %vm169, %v487, %v1473
    %vm1494 = vcmask 130048
    %v1495 = vsel %vm1494, %v1492, %v1479
    %v1496 = vsel %vm1494, %v1493, %v1481
    %vm1497 = vcmask 195584
    %v1498 = vsel %vm1497, %v1495, %v1487
    %v1499 = vsel %vm1497, %v1496, %v1489
    %v1500 = vcombine.high %v1498, 0.0
    %v1502 = vunpack.c.l.s4 1983009808
    %v1503 = vunpack.c.0.s8 %v1502
    %v1504 = vlaneseq
    %v1505 = vshrl.u32 %v1504, 7
    %v1506 = vsub.s32 %v1503, %v1505
    %v1507 = vrot.slane %v1498, %v1506
    %v1509 = vunpack.c.l.s4 1983009808
    %v1510 = vunpack.c.0.s8 %v1509
    %v1511 = vlaneseq
    %v1512 = vshrl.u32 %v1511, 7
    %v1513 = vsub.s32 %v1510, %v1512
    %v1514 = vrot.slane %v1500, %v1513
    %v1515 = vcombine.high %v1499, 0.0
    %v1517 = vunpack.c.l.s4 1983009808
    %v1518 = vunpack.c.0.s8 %v1517
    %v1519 = vlaneseq
    %v1520 = vshrl.u32 %v1519, 7
    %v1521 = vsub.s32 %v1518, %v1520
    %v1522 = vrot.slane %v1499, %v1521
    %v1524 = vunpack.c.l.s4 1983009808
    %v1525 = vunpack.c.0.s8 %v1524
    %v1526 = vlaneseq
    %v1527 = vshrl.u32 %v1526, 7
    %v1528 = vsub.s32 %v1525, %v1527
    %v1529 = vrot.slane %v1515, %v1528
    %v1530 = vcombine.low %v1507, %v1522
    %v1531 = vcombine.high %v1507, %v1522
    %v1533 = vunpack.c.l.s4 1934713408
    %v1534 = vunpack.c.0.s8 %v1533
    %v1535 = vlaneseq
    %v1536 = vshrl.u32 %v1535, 7
    %v1537 = vsub.s32 %v1534, %v1536
    %v1538 = vrot.slane %v1530, %v1537
    %v1540 = vunpack.c.l.s4 1934713408
    %v1541 = vunpack.c.0.s8 %v1540
    %v1542 = vlaneseq
    %v1543 = vshrl.u32 %v1542, 7
    %v1544 = vsub.s32 %v1541, %v1543
    %v1545 = vrot.slane %v1531, %v1544
    %v1546 = vcombine.low %v1514, %v1529
    %v1547 = vcombine.high %v1514, %v1529
    %v1549 = vunpack.c.l.s4 1934713408
    %v1550 = vunpack.c.0.s8 %v1549
    %v1551 = vlaneseq
    %v1552 = vshrl.u32 %v1551, 7
    %v1553 = vsub.s32 %v1550, %v1552
    %v1554 = vrot.slane %v1546, %v1553
    %v1556 = vunpack.c.l.s4 1934713408
    %v1557 = vunpack.c.0.s8 %v1556
    %v1558 = vlaneseq
    %v1559 = vshrl.u32 %v1558, 7
    %v1560 = vsub.s32 %v1557, %v1559
    %v1561 = vrot.slane %v1547, %v1560
    %v1562 = vcombine.high %v1538, 0.0
    %v1563 = vcombine.high %v1545, 0.0
    %v1564 = vcombine.high %v1554, 0.0
    %v1565 = vcombine.high %v1561, 0.0
    %1567 = vrot.lane.b32.xlu0 %v1562, 32
    %v1568 = vpop.permute.xlu0 %1567
    %1571 = vrot.lane.b32.xlu0 %v1545, 64
    %v1572 = vpop.permute.xlu0 %1571
    %1575 = vrot.lane.b32.xlu0 %v1563, 96
    %v1576 = vpop.permute.xlu0 %1575
    %1579 = vrot.lane.b32.xlu0 %v1564, 32
    %v1580 = vpop.permute.xlu0 %1579
    %1583 = vrot.lane.b32.xlu0 %v1561, 64
    %v1584 = vpop.permute.xlu0 %1583
    %1587 = vrot.lane.b32.xlu0 %v1565, 96
    %v1588 = vpop.permute.xlu0 %1587
    %v1590 = vsel %vm59, %v1538, %v1568
    %vm1591 = vcmask 523264
    %v1592 = vsel %vm1591, %v1590, %v1572
    %vm1593 = vcmask 785408
    %v1594 = vsel %vm1593, %v1592, %v1576
    %v1595 = vsel %vm59, %v1554, %v1580
    %v1596 = vsel %vm1591, %v1595, %v1584
    %v1597 = vsel %vm1593, %v1596, %v1588
    %v1600 = vcombine.low %v1594, %v1597
    %v1602 = vunpack.c.l.s4 1983009808
    %v1603 = vunpack.c.0.s8 %v1602
    %v1604 = vlaneseq
    %v1605 = vshrl.u32 %v1604, 7
    %v1606 = vsub.s32 %v1603, %v1605
    %v1607 = vrot.slane %v1600, %v1606
    %1609 = vst [vmem:[#allocation7] sm:$0xf] %v1607
    // Predicated region
    $region26: #{tpu_custom_call.1} parent=1 // pred_check
      _
    $region27: #{tpu_custom_call.1} parent=1 // pred_check_branch
      %1611 = sbr.rel (0) target = $region29
    $region28: #{tpu_custom_call.1} parent=1 // pred_region
      %s1613 = ssub.s32 64, 64
      %1614 = vsyncadd [#allocation4], %s1613
      %s1616 = sshll.u32 [#allocation7], 4
      %s1617 = int_to_ptr.vmem [resolvable:$true] %s1616
      %1619 = dma.vmem_to_hbm [thread:$0]  %s1617, 64, %s4, [#allocation4]
    $region29: #{tpu_custom_call.1} parent=1 // pred_fallthru
      _
    // Predicated region
    $region30: #{tpu_custom_call.1} parent=1 // pred_check
      _
    $region31: #{tpu_custom_call.1} parent=1 // pred_check_branch
      %1621 = sbr.rel (0) target = $region33
    $region32: #{tpu_custom_call.1} parent=1 // pred_region
      %1622 = dma.done [#allocation4], 64
    $region33: #{tpu_custom_call.1} parent=1 // pred_fallthru
      _
    %1623 = vsyncpa [#allocation3], 1
    %1624 = vsyncpa [#allocation6], 1
    %1625 = vsyncpa [#allocation4], 1

</llo_original>
